<compile_context>
chip_gen: v5e
topology: v5e:2x2
jax: 0.10.0
libtpu: 0.0.40
codegen_flags: <defaults>
</compile_context>

<pallas_src>
import functools

import jax
import jax.numpy as jnp
from jax import lax
from jax.experimental import pallas as pl
from jax.experimental.pallas import tpu as pltpu

EPS = 1e-5


# ------------------------------- Pallas kernel ------------------------------- #

def _double_conv_kernel(x_ref, w1_ref, g1_ref, bt1_ref, w2_ref, g2_ref, bt2_ref,
                        o_ref, pt1_ref, pt2_ref,
                        *, N, H, W, C_in, C_mid, C_out):
    """Fully fused DoubleConv forward for the whole (small) batch.

    x_ref : (N, C_in, H*W)  f32   input, spatial dims flattened onto lanes
    w*_ref: (C_out_l, 9*C_in_l)   im2col weight slab, K ordered (dy, dx, ci)
    g*/bt*: (C_out_l, 1)    f32   BatchNorm gamma / beta
    o_ref : (N, C_out, H*W) f32   output (lane-dense, 256 lanes)
    pt*   : VMEM scratch (9*C_in_l, H*W) im2col patch matrices (compute dtype)
    """
    HW = H * W
    inv_count = 1.0 / float(N * HW)

    # w-coordinate of every flattened pixel p = h*W + w  (constants, built once).
    lane = lax.broadcasted_iota(jnp.int32, (1, HW), 1)
    col = (lane & (W - 1)) if (W & (W - 1)) == 0 else (lane % W)
    not_first_col = col != 0          # pixels that have a left neighbour
    not_last_col = col != (W - 1)     # pixels that have a right neighbour

    def shifted_tap(a, dy, dx):
        """a: (C, HW) f32 flattened image. Returns act[ci, h+dy-1, w+dx-1] with zeros where
        the 3x3 tap falls outside the image. Shift s = (dy-1)*W + (dx-1) is realized with a
        lane slice + concat-with-zeros; only the left/right column wrap needs masking (the
        zero fill already covers the top/bottom halo rows)."""
        s = (dy - 1) * W + (dx - 1)
        if s == 0:
            piece = a
        elif s > 0:
            z = jnp.zeros((a.shape[0], s), a.dtype)
            piece = jnp.concatenate([a[:, s:], z], axis=1)
        else:
            z = jnp.zeros((a.shape[0], -s), a.dtype)
            piece = jnp.concatenate([z, a[:, :s]], axis=1)
        if dx == 0:                                  # reads w-1: invalid at w == 0
            piece = jnp.where(not_first_col, piece, 0.0)
        elif dx == 2:                                # reads w+1: invalid at w == W-1
            piece = jnp.where(not_last_col, piece, 0.0)
        return piece

    def conv_layer(acts, C_i, C_o, pt_ref, w_ref):
        """acts: list of N (C_i, HW) f32 activations.
        Returns (ys, mean, var): N conv outputs (C_o, HW) f32 + per-channel batch stats."""
        wmat = w_ref[...]                            # (C_o, 9*C_i), compute dtype
        ys = []
        s1 = jnp.zeros((C_o, 1), jnp.float32)
        s2 = jnp.zeros((C_o, 1), jnp.float32)
        for n in range(N):
            # Build the im2col patch matrix (9*C_i, HW); row block t = tap (dy, dx).
            for t in range(9):
                dy, dx = t // 3, t % 3
                piece = shifted_tap(acts[n], dy, dx)               # (C_i, HW) f32
                pt_ref[t * C_i:(t + 1) * C_i, :] = piece.astype(pt_ref.dtype)
            # Single MXU matmul with K = 9*C_i (instead of nine K=C_i dots).
            y = jnp.dot(wmat, pt_ref[...],
                        preferred_element_type=jnp.float32)        # (C_o, HW) f32
            ys.append(y)
            # Fused batch statistics (no extra HBM pass over the activation).
            s1 = s1 + jnp.sum(y, axis=1, keepdims=True)
            s2 = s2 + jnp.sum(y * y, axis=1, keepdims=True)
        mean = s1 * inv_count
        var = s2 * inv_count - mean * mean           # biased variance (training-mode BN)
        return ys, mean, var

    # -------- layer 1: conv -> BN(batch stats) -> ReLU (all in VMEM) --------
    x = [x_ref[n].astype(jnp.float32) for n in range(N)]            # (C_in, HW)
    y1, mean1, var1 = conv_layer(x, C_in, C_mid, pt1_ref, w1_ref)
    scale1 = g1_ref[...] * lax.rsqrt(var1 + EPS)                     # (C_mid, 1)
    shift1 = bt1_ref[...] - mean1 * scale1
    a1 = [jnp.maximum(y * scale1 + shift1, 0.0) for y in y1]         # (C_mid, HW) f32

    # -------- layer 2: conv -> BN(batch stats) -> ReLU --------
    y2, mean2, var2 = conv_layer(a1, C_mid, C_out, pt2_ref, w2_ref)
    scale2 = g2_ref[...] * lax.rsqrt(var2 + EPS)                     # (C_out, 1)
    shift2 = bt2_ref[...] - mean2 * scale2
    for n in range(N):
        o_ref[n] = jnp.maximum(y2[n] * scale2 + shift2, 0.0).astype(o_ref.dtype)


# ------------------------------ Pallas wrapper ------------------------------- #

def _fold_weight(w_oihw):
    """(C_out, C_in, 3, 3) -> (C_out, 9*C_in); K ordered (dy, dx, ci) to match the
    in-kernel im2col patch matrix."""
    c_out, c_in = w_oihw.shape[0], w_oihw.shape[1]
    return jnp.transpose(w_oihw, (0, 2, 3, 1)).reshape(c_out, 9 * c_in)


def double_conv_pallas(x_nchw, params, *, compute_dtype=jnp.float32):
    """DoubleConv forward. x_nchw: (N, C_in, H, W) f32 -> (N, C_out, H, W) f32.

    compute_dtype selects the MXU operand dtype (jnp.bfloat16 on v6e/v7x for ~4x MXU rate and
    half the operand footprint); accumulation and BN/ReLU math stay f32.
    """
    N, C_in, H, W = x_nchw.shape
    C_mid = params["w1"].shape[0]
    C_out = params["w2"].shape[0]
    HW = H * W

    w1 = _fold_weight(params["w1"]).astype(compute_dtype)
    w2 = _fold_weight(params["w2"]).astype(compute_dtype)
    g1 = params["g1"].reshape(C_mid, 1).astype(jnp.float32)
    bt1 = params["beta1"].reshape(C_mid, 1).astype(jnp.float32)
    g2 = params["g2"].reshape(C_out, 1).astype(jnp.float32)
    bt2 = params["beta2"].reshape(C_out, 1).astype(jnp.float32)
    # NOTE: conv biases b1/b2 are intentionally unused — training-mode BN cancels them exactly
    # (the reference keeps them; the test below confirms equality).

    x_flat = x_nchw.reshape(N, C_in, HW).astype(jnp.float32)   # free row-major reshape

    kernel = functools.partial(
        _double_conv_kernel, N=N, H=H, W=W, C_in=C_in, C_mid=C_mid, C_out=C_out)

    out = pl.pallas_call(
        kernel,
        out_shape=jax.ShapeDtypeStruct((N, C_out, HW), jnp.float32),
        grid=(1,),
        in_specs=[
            pl.BlockSpec((N, C_in, HW), lambda i: (0, 0, 0)),
            pl.BlockSpec((C_mid, 9 * C_in), lambda i: (0, 0)),
            pl.BlockSpec((C_mid, 1), lambda i: (0, 0)),
            pl.BlockSpec((C_mid, 1), lambda i: (0, 0)),
            pl.BlockSpec((C_out, 9 * C_mid), lambda i: (0, 0)),
            pl.BlockSpec((C_out, 1), lambda i: (0, 0)),
            pl.BlockSpec((C_out, 1), lambda i: (0, 0)),
        ],
        out_specs=pl.BlockSpec((N, C_out, HW), lambda i: (0, 0, 0)),
        scratch_shapes=[
            pltpu.VMEM((9 * C_in, HW), compute_dtype),    # im2col patches, layer 1
            pltpu.VMEM((9 * C_mid, HW), compute_dtype),   # im2col patches, layer 2
        ],
        compiler_params=pltpu.CompilerParams(dimension_semantics=("arbitrary",)),
    )(x_flat, w1, g1, bt1, w2, g2, bt2)

    return out.reshape(N, C_out, H, W)                 # free row-major reshape (still NCHW)


# ------------------------------ JAX reference -------------------------------- #

def double_conv_reference(x_nchw, params):
    x = x_nchw.astype(jnp.float32)
    for layer in ("1", "2"):
        w = params["w" + layer]
        b = params["b" + layer]
        gamma = params["g" + layer]
        beta = params["beta" + layer]
        y = lax.conv_general_dilated(
            x, w, window_strides=(1, 1), padding=((1, 1), (1, 1)),
            dimension_numbers=("NCHW", "OIHW", "NCHW"))
        y = y + b[None, :, None, None]
        mean = jnp.mean(y, axis=(0, 2, 3), keepdims=True)
        var = jnp.var(y, axis=(0, 2, 3), keepdims=True)
        y = (y - mean) / jnp.sqrt(var + EPS)
        y = y * gamma[None, :, None, None] + beta[None, :, None, None]
        x = jnp.maximum(y, 0.0)
    return x


# ----------------------------------- main ------------------------------------ #

if __name__ == "__main__":
    N, C_IN, C_MID, C_OUT, H, W = 2, 4, 8, 8, 16, 16

    key = jax.random.PRNGKey(0)
    k = jax.random.split(key, 7)
    params = {
        "w1": 0.1 * jax.random.normal(k[0], (C_MID, C_IN, 3, 3), jnp.float32),
        "b1": 0.1 * jax.random.normal(k[1], (C_MID,), jnp.float32),
        "g1": 1.0 + 0.1 * jax.random.normal(k[2], (C_MID,), jnp.float32),
        "beta1": 0.1 * jax.random.normal(k[3], (C_MID,), jnp.float32),
        "w2": 0.1 * jax.random.normal(k[4], (C_OUT, C_MID, 3, 3), jnp.float32),
        "b2": 0.1 * jax.random.normal(k[5], (C_OUT,), jnp.float32),
        "g2": jnp.ones((C_OUT,), jnp.float32),
        "beta2": jnp.zeros((C_OUT,), jnp.float32),
    }
    x = jax.random.normal(k[6], (N, C_IN, H, W), jnp.float32)

    ref = jax.block_until_ready(double_conv_reference(x, params))

    # f32 path (default): tight tolerance against the f32 reference.
    out = jax.block_until_ready(double_conv_pallas(x, params))
    assert out.shape == (N, C_OUT, H, W), out.shape
    assert jnp.allclose(out, ref, rtol=1e-4, atol=1e-4), float(jnp.max(jnp.abs(out - ref)))

    # bf16 MXU-operand fast path (v6e/v7x): f32 accumulation; looser tolerance due to
    # bf16 operand rounding.
    out_bf16 = jax.block_until_ready(
        double_conv_pallas(x, params, compute_dtype=jnp.bfloat16))
    assert jnp.allclose(out_bf16, ref, rtol=5e-2, atol=5e-2), \
        float(jnp.max(jnp.abs(out_bf16 - ref)))

    print("KERNEL_OK")
</pallas_src>

<mosaic_0001>
module attributes {stable_mosaic.version = 11 : i64} {
  func.func @_double_conv_kernel(%arg0: i32, %arg1: memref<2x4x256xf32, #tpu.memory_space<vmem>>, %arg2: memref<8x36xf32, #tpu.memory_space<vmem>>, %arg3: memref<8x1xf32, #tpu.memory_space<vmem>>, %arg4: memref<8x1xf32, #tpu.memory_space<vmem>>, %arg5: memref<8x72xf32, #tpu.memory_space<vmem>>, %arg6: memref<8x1xf32, #tpu.memory_space<vmem>>, %arg7: memref<8x1xf32, #tpu.memory_space<vmem>>, %arg8: memref<2x8x256xf32, #tpu.memory_space<vmem>>, %arg9: memref<36x256xf32, #tpu.memory_space<vmem>>, %arg10: memref<72x256xf32, #tpu.memory_space<vmem>>) attributes {dimension_semantics = [#tpu.dimension_semantics<arbitrary>], iteration_bounds = array<i64: 1>, scalar_prefetch = 0 : i64, scratch_operands = 2 : i64, tpu.core_type = #tpu.core_type<tc>, window_params = [{pipeline_mode = #tpu.pipeline_mode<synchronous>, transform_indices = @transform_0, window_bounds = array<i64: 2, 4, 256>}, {pipeline_mode = #tpu.pipeline_mode<synchronous>, transform_indices = @transform_1, window_bounds = array<i64: 8, 36>}, {pipeline_mode = #tpu.pipeline_mode<synchronous>, transform_indices = @transform_2, window_bounds = array<i64: 8, 1>}, {pipeline_mode = #tpu.pipeline_mode<synchronous>, transform_indices = @transform_3, window_bounds = array<i64: 8, 1>}, {pipeline_mode = #tpu.pipeline_mode<synchronous>, transform_indices = @transform_4, window_bounds = array<i64: 8, 72>}, {pipeline_mode = #tpu.pipeline_mode<synchronous>, transform_indices = @transform_5, window_bounds = array<i64: 8, 1>}, {pipeline_mode = #tpu.pipeline_mode<synchronous>, transform_indices = @transform_6, window_bounds = array<i64: 8, 1>}, {pipeline_mode = #tpu.pipeline_mode<synchronous>, transform_indices = @transform_7, window_bounds = array<i64: 2, 8, 256>}]} {
    %0 = tpu.iota {dimensions = array<i32: 1>} : vector<1x256xi32>
    %c15_i32 = arith.constant 15 : i32
    %1 = vector.broadcast %c15_i32 : i32 to vector<1x256xi32>
    %2 = arith.andi %0, %1 : vector<1x256xi32>
    %c0_i32 = arith.constant 0 : i32
    %3 = vector.broadcast %c0_i32 : i32 to vector<1x256xi32>
    %4 = arith.cmpi ne, %2, %3 : vector<1x256xi32>
    %c15_i32_0 = arith.constant 15 : i32
    %5 = vector.broadcast %c15_i32_0 : i32 to vector<1x256xi32>
    %6 = arith.cmpi ne, %2, %5 : vector<1x256xi32>
    %c0 = arith.constant 0 : index
    %c0_1 = arith.constant 0 : index
    %c0_2 = arith.constant 0 : index
    %7 = vector.load %arg1[%c0, %c0_1, %c0_2] : memref<2x4x256xf32, #tpu.memory_space<vmem>>, vector<1x4x256xf32>
    %8 = vector.shape_cast %7 : vector<1x4x256xf32> to vector<4x256xf32>
    %c1 = arith.constant 1 : index
    %c0_3 = arith.constant 0 : index
    %c0_4 = arith.constant 0 : index
    %9 = vector.load %arg1[%c1, %c0_3, %c0_4] : memref<2x4x256xf32, #tpu.memory_space<vmem>>, vector<1x4x256xf32>
    %10 = vector.shape_cast %9 : vector<1x4x256xf32> to vector<4x256xf32>
    %c0_5 = arith.constant 0 : index
    %c0_6 = arith.constant 0 : index
    %11 = vector.load %arg2[%c0_5, %c0_6] : memref<8x36xf32, #tpu.memory_space<vmem>>, vector<8x36xf32>
    %cst = arith.constant 0.000000e+00 : f32
    %12 = vector.broadcast %cst : f32 to vector<8x1xf32>
    %cst_7 = arith.constant 0.000000e+00 : f32
    %13 = vector.broadcast %cst_7 : f32 to vector<8x1xf32>
    %cst_8 = arith.constant 0.000000e+00 : f32
    %14 = vector.broadcast %cst_8 : f32 to vector<4x17xf32>
    %15 = vector.extract_strided_slice %8 {offsets = [0, 0], sizes = [4, 239], strides = [1, 1]} : vector<4x256xf32> to vector<4x239xf32>
    %16 = tpu.concatenate %14, %15 in 1 : vector<4x17xf32>, vector<4x239xf32> -> vector<4x256xf32>
    %cst_9 = arith.constant 0.000000e+00 : f32
    %17 = vector.shape_cast %4 : vector<1x256xi1> to vector<1x256xi1>
    %18 = vector.broadcast %17 : vector<1x256xi1> to vector<4x256xi1>
    %19 = vector.broadcast %cst_9 : f32 to vector<4x256xf32>
    %20 = arith.select %18, %16, %19 : vector<4x256xi1>, vector<4x256xf32>
    %c0_10 = arith.constant 0 : index
    %c0_11 = arith.constant 0 : index
    %21 = vector.load %arg9[%c0_10, %c0_11] : memref<36x256xf32, #tpu.memory_space<vmem>>, vector<4x256xf32>
    tpu.vector_store %arg9[%c0_10, %c0_11], %20 {strides = array<i32>} : memref<36x256xf32, #tpu.memory_space<vmem>>, vector<4x256xf32>,
    %cst_12 = arith.constant 0.000000e+00 : f32
    %22 = vector.broadcast %cst_12 : f32 to vector<4x16xf32>
    %23 = vector.extract_strided_slice %8 {offsets = [0, 0], sizes = [4, 240], strides = [1, 1]} : vector<4x256xf32> to vector<4x240xf32>
    %24 = tpu.concatenate %22, %23 in 1 : vector<4x16xf32>, vector<4x240xf32> -> vector<4x256xf32>
    %c4 = arith.constant 4 : index
    %c0_13 = arith.constant 0 : index
    %25 = vector.load %arg9[%c4, %c0_13] : memref<36x256xf32, #tpu.memory_space<vmem>>, vector<4x256xf32>
    tpu.vector_store %arg9[%c4, %c0_13], %24 {strides = array<i32>} : memref<36x256xf32, #tpu.memory_space<vmem>>, vector<4x256xf32>,
    %cst_14 = arith.constant 0.000000e+00 : f32
    %26 = vector.broadcast %cst_14 : f32 to vector<4x15xf32>
    %27 = vector.extract_strided_slice %8 {offsets = [0, 0], sizes = [4, 241], strides = [1, 1]} : vector<4x256xf32> to vector<4x241xf32>
    %28 = tpu.concatenate %26, %27 in 1 : vector<4x15xf32>, vector<4x241xf32> -> vector<4x256xf32>
    %cst_15 = arith.constant 0.000000e+00 : f32
    %29 = vector.shape_cast %6 : vector<1x256xi1> to vector<1x256xi1>
    %30 = vector.broadcast %29 : vector<1x256xi1> to vector<4x256xi1>
    %31 = vector.broadcast %cst_15 : f32 to vector<4x256xf32>
    %32 = arith.select %30, %28, %31 : vector<4x256xi1>, vector<4x256xf32>
    %c8 = arith.constant 8 : index
    %c0_16 = arith.constant 0 : index
    %33 = vector.load %arg9[%c8, %c0_16] : memref<36x256xf32, #tpu.memory_space<vmem>>, vector<4x256xf32>
    tpu.vector_store %arg9[%c8, %c0_16], %32 {strides = array<i32>} : memref<36x256xf32, #tpu.memory_space<vmem>>, vector<4x256xf32>,
    %cst_17 = arith.constant 0.000000e+00 : f32
    %34 = vector.broadcast %cst_17 : f32 to vector<4x1xf32>
    %35 = vector.extract_strided_slice %8 {offsets = [0, 0], sizes = [4, 255], strides = [1, 1]} : vector<4x256xf32> to vector<4x255xf32>
    %36 = tpu.concatenate %34, %35 in 1 : vector<4x1xf32>, vector<4x255xf32> -> vector<4x256xf32>
    %cst_18 = arith.constant 0.000000e+00 : f32
    %37 = vector.shape_cast %4 : vector<1x256xi1> to vector<1x256xi1>
    %38 = vector.broadcast %37 : vector<1x256xi1> to vector<4x256xi1>
    %39 = vector.broadcast %cst_18 : f32 to vector<4x256xf32>
    %40 = arith.select %38, %36, %39 : vector<4x256xi1>, vector<4x256xf32>
    %c12 = arith.constant 12 : index
    %c0_19 = arith.constant 0 : index
    %41 = vector.load %arg9[%c12, %c0_19] : memref<36x256xf32, #tpu.memory_space<vmem>>, vector<4x256xf32>
    tpu.vector_store %arg9[%c12, %c0_19], %40 {strides = array<i32>} : memref<36x256xf32, #tpu.memory_space<vmem>>, vector<4x256xf32>,
    %c16 = arith.constant 16 : index
    %c0_20 = arith.constant 0 : index
    %42 = vector.load %arg9[%c16, %c0_20] : memref<36x256xf32, #tpu.memory_space<vmem>>, vector<4x256xf32>
    tpu.vector_store %arg9[%c16, %c0_20], %8 {strides = array<i32>} : memref<36x256xf32, #tpu.memory_space<vmem>>, vector<4x256xf32>,
    %cst_21 = arith.constant 0.000000e+00 : f32
    %43 = vector.broadcast %cst_21 : f32 to vector<4x1xf32>
    %44 = vector.extract_strided_slice %8 {offsets = [0, 1], sizes = [4, 255], strides = [1, 1]} : vector<4x256xf32> to vector<4x255xf32>
    %45 = tpu.concatenate %44, %43 in 1 : vector<4x255xf32>, vector<4x1xf32> -> vector<4x256xf32>
    %cst_22 = arith.constant 0.000000e+00 : f32
    %46 = vector.shape_cast %6 : vector<1x256xi1> to vector<1x256xi1>
    %47 = vector.broadcast %46 : vector<1x256xi1> to vector<4x256xi1>
    %48 = vector.broadcast %cst_22 : f32 to vector<4x256xf32>
    %49 = arith.select %47, %45, %48 : vector<4x256xi1>, vector<4x256xf32>
    %c20 = arith.constant 20 : index
    %c0_23 = arith.constant 0 : index
    %50 = vector.load %arg9[%c20, %c0_23] : memref<36x256xf32, #tpu.memory_space<vmem>>, vector<4x256xf32>
    tpu.vector_store %arg9[%c20, %c0_23], %49 {strides = array<i32>} : memref<36x256xf32, #tpu.memory_space<vmem>>, vector<4x256xf32>,
    %cst_24 = arith.constant 0.000000e+00 : f32
    %51 = vector.broadcast %cst_24 : f32 to vector<4x15xf32>
    %52 = vector.extract_strided_slice %8 {offsets = [0, 15], sizes = [4, 241], strides = [1, 1]} : vector<4x256xf32> to vector<4x241xf32>
    %53 = tpu.concatenate %52, %51 in 1 : vector<4x241xf32>, vector<4x15xf32> -> vector<4x256xf32>
    %cst_25 = arith.constant 0.000000e+00 : f32
    %54 = vector.shape_cast %4 : vector<1x256xi1> to vector<1x256xi1>
    %55 = vector.broadcast %54 : vector<1x256xi1> to vector<4x256xi1>
    %56 = vector.broadcast %cst_25 : f32 to vector<4x256xf32>
    %57 = arith.select %55, %53, %56 : vector<4x256xi1>, vector<4x256xf32>
    %c24 = arith.constant 24 : index
    %c0_26 = arith.constant 0 : index
    %58 = vector.load %arg9[%c24, %c0_26] : memref<36x256xf32, #tpu.memory_space<vmem>>, vector<4x256xf32>
    tpu.vector_store %arg9[%c24, %c0_26], %57 {strides = array<i32>} : memref<36x256xf32, #tpu.memory_space<vmem>>, vector<4x256xf32>,
    %cst_27 = arith.constant 0.000000e+00 : f32
    %59 = vector.broadcast %cst_27 : f32 to vector<4x16xf32>
    %60 = vector.extract_strided_slice %8 {offsets = [0, 16], sizes = [4, 240], strides = [1, 1]} : vector<4x256xf32> to vector<4x240xf32>
    %61 = tpu.concatenate %60, %59 in 1 : vector<4x240xf32>, vector<4x16xf32> -> vector<4x256xf32>
    %c28 = arith.constant 28 : index
    %c0_28 = arith.constant 0 : index
    %62 = vector.load %arg9[%c28, %c0_28] : memref<36x256xf32, #tpu.memory_space<vmem>>, vector<4x256xf32>
    tpu.vector_store %arg9[%c28, %c0_28], %61 {strides = array<i32>} : memref<36x256xf32, #tpu.memory_space<vmem>>, vector<4x256xf32>,
    %cst_29 = arith.constant 0.000000e+00 : f32
    %63 = vector.broadcast %cst_29 : f32 to vector<4x17xf32>
    %64 = vector.extract_strided_slice %8 {offsets = [0, 17], sizes = [4, 239], strides = [1, 1]} : vector<4x256xf32> to vector<4x239xf32>
    %65 = tpu.concatenate %64, %63 in 1 : vector<4x239xf32>, vector<4x17xf32> -> vector<4x256xf32>
    %cst_30 = arith.constant 0.000000e+00 : f32
    %66 = vector.shape_cast %6 : vector<1x256xi1> to vector<1x256xi1>
    %67 = vector.broadcast %66 : vector<1x256xi1> to vector<4x256xi1>
    %68 = vector.broadcast %cst_30 : f32 to vector<4x256xf32>
    %69 = arith.select %67, %65, %68 : vector<4x256xi1>, vector<4x256xf32>
    %c32 = arith.constant 32 : index
    %c0_31 = arith.constant 0 : index
    %70 = vector.load %arg9[%c32, %c0_31] : memref<36x256xf32, #tpu.memory_space<vmem>>, vector<4x256xf32>
    tpu.vector_store %arg9[%c32, %c0_31], %69 {strides = array<i32>} : memref<36x256xf32, #tpu.memory_space<vmem>>, vector<4x256xf32>,
    %c0_32 = arith.constant 0 : index
    %c0_33 = arith.constant 0 : index
    %71 = vector.load %arg9[%c0_32, %c0_33] : memref<36x256xf32, #tpu.memory_space<vmem>>, vector<36x256xf32>
    %cst_34 = arith.constant dense<0.000000e+00> : vector<8x256xf32>
    %72 = tpu.matmul %11, %71, %cst_34 {dimension_numbers = #tpu.dot_dimension_numbers<[1], [0], [0], [1], [0, 0, 1, 1], [], []>} : vector<8x36xf32>, vector<36x256xf32>, vector<8x256xf32> -> vector<8x256xf32>
    %cst_35 = arith.constant dense<0.000000e+00> : vector<8xf32>
    %73 = vector.multi_reduction <add>, %72, %cst_35 [1] : vector<8x256xf32> to vector<8xf32>
    %74 = vector.shape_cast %73 : vector<8xf32> to vector<8x1xf32>
    %75 = arith.addf %12, %74 : vector<8x1xf32>
    %76 = arith.mulf %72, %72 : vector<8x256xf32>
    %cst_36 = arith.constant dense<0.000000e+00> : vector<8xf32>
    %77 = vector.multi_reduction <add>, %76, %cst_36 [1] : vector<8x256xf32> to vector<8xf32>
    %78 = vector.shape_cast %77 : vector<8xf32> to vector<8x1xf32>
    %79 = arith.addf %13, %78 : vector<8x1xf32>
    %cst_37 = arith.constant 0.000000e+00 : f32
    %80 = vector.broadcast %cst_37 : f32 to vector<4x17xf32>
    %81 = vector.extract_strided_slice %10 {offsets = [0, 0], sizes = [4, 239], strides = [1, 1]} : vector<4x256xf32> to vector<4x239xf32>
    %82 = tpu.concatenate %80, %81 in 1 : vector<4x17xf32>, vector<4x239xf32> -> vector<4x256xf32>
    %cst_38 = arith.constant 0.000000e+00 : f32
    %83 = vector.shape_cast %4 : vector<1x256xi1> to vector<1x256xi1>
    %84 = vector.broadcast %83 : vector<1x256xi1> to vector<4x256xi1>
    %85 = vector.broadcast %cst_38 : f32 to vector<4x256xf32>
    %86 = arith.select %84, %82, %85 : vector<4x256xi1>, vector<4x256xf32>
    %c0_39 = arith.constant 0 : index
    %c0_40 = arith.constant 0 : index
    %87 = vector.load %arg9[%c0_39, %c0_40] : memref<36x256xf32, #tpu.memory_space<vmem>>, vector<4x256xf32>
    tpu.vector_store %arg9[%c0_39, %c0_40], %86 {strides = array<i32>} : memref<36x256xf32, #tpu.memory_space<vmem>>, vector<4x256xf32>,
    %cst_41 = arith.constant 0.000000e+00 : f32
    %88 = vector.broadcast %cst_41 : f32 to vector<4x16xf32>
    %89 = vector.extract_strided_slice %10 {offsets = [0, 0], sizes = [4, 240], strides = [1, 1]} : vector<4x256xf32> to vector<4x240xf32>
    %90 = tpu.concatenate %88, %89 in 1 : vector<4x16xf32>, vector<4x240xf32> -> vector<4x256xf32>
    %c4_42 = arith.constant 4 : index
    %c0_43 = arith.constant 0 : index
    %91 = vector.load %arg9[%c4_42, %c0_43] : memref<36x256xf32, #tpu.memory_space<vmem>>, vector<4x256xf32>
    tpu.vector_store %arg9[%c4_42, %c0_43], %90 {strides = array<i32>} : memref<36x256xf32, #tpu.memory_space<vmem>>, vector<4x256xf32>,
    %cst_44 = arith.constant 0.000000e+00 : f32
    %92 = vector.broadcast %cst_44 : f32 to vector<4x15xf32>
    %93 = vector.extract_strided_slice %10 {offsets = [0, 0], sizes = [4, 241], strides = [1, 1]} : vector<4x256xf32> to vector<4x241xf32>
    %94 = tpu.concatenate %92, %93 in 1 : vector<4x15xf32>, vector<4x241xf32> -> vector<4x256xf32>
    %cst_45 = arith.constant 0.000000e+00 : f32
    %95 = vector.shape_cast %6 : vector<1x256xi1> to vector<1x256xi1>
    %96 = vector.broadcast %95 : vector<1x256xi1> to vector<4x256xi1>
    %97 = vector.broadcast %cst_45 : f32 to vector<4x256xf32>
    %98 = arith.select %96, %94, %97 : vector<4x256xi1>, vector<4x256xf32>
    %c8_46 = arith.constant 8 : index
    %c0_47 = arith.constant 0 : index
    %99 = vector.load %arg9[%c8_46, %c0_47] : memref<36x256xf32, #tpu.memory_space<vmem>>, vector<4x256xf32>
    tpu.vector_store %arg9[%c8_46, %c0_47], %98 {strides = array<i32>} : memref<36x256xf32, #tpu.memory_space<vmem>>, vector<4x256xf32>,
    %cst_48 = arith.constant 0.000000e+00 : f32
    %100 = vector.broadcast %cst_48 : f32 to vector<4x1xf32>
    %101 = vector.extract_strided_slice %10 {offsets = [0, 0], sizes = [4, 255], strides = [1, 1]} : vector<4x256xf32> to vector<4x255xf32>
    %102 = tpu.concatenate %100, %101 in 1 : vector<4x1xf32>, vector<4x255xf32> -> vector<4x256xf32>
    %cst_49 = arith.constant 0.000000e+00 : f32
    %103 = vector.shape_cast %4 : vector<1x256xi1> to vector<1x256xi1>
    %104 = vector.broadcast %103 : vector<1x256xi1> to vector<4x256xi1>
    %105 = vector.broadcast %cst_49 : f32 to vector<4x256xf32>
    %106 = arith.select %104, %102, %105 : vector<4x256xi1>, vector<4x256xf32>
    %c12_50 = arith.constant 12 : index
    %c0_51 = arith.constant 0 : index
    %107 = vector.load %arg9[%c12_50, %c0_51] : memref<36x256xf32, #tpu.memory_space<vmem>>, vector<4x256xf32>
    tpu.vector_store %arg9[%c12_50, %c0_51], %106 {strides = array<i32>} : memref<36x256xf32, #tpu.memory_space<vmem>>, vector<4x256xf32>,
    %c16_52 = arith.constant 16 : index
    %c0_53 = arith.constant 0 : index
    %108 = vector.load %arg9[%c16_52, %c0_53] : memref<36x256xf32, #tpu.memory_space<vmem>>, vector<4x256xf32>
    tpu.vector_store %arg9[%c16_52, %c0_53], %10 {strides = array<i32>} : memref<36x256xf32, #tpu.memory_space<vmem>>, vector<4x256xf32>,
    %cst_54 = arith.constant 0.000000e+00 : f32
    %109 = vector.broadcast %cst_54 : f32 to vector<4x1xf32>
    %110 = vector.extract_strided_slice %10 {offsets = [0, 1], sizes = [4, 255], strides = [1, 1]} : vector<4x256xf32> to vector<4x255xf32>
    %111 = tpu.concatenate %110, %109 in 1 : vector<4x255xf32>, vector<4x1xf32> -> vector<4x256xf32>
    %cst_55 = arith.constant 0.000000e+00 : f32
    %112 = vector.shape_cast %6 : vector<1x256xi1> to vector<1x256xi1>
    %113 = vector.broadcast %112 : vector<1x256xi1> to vector<4x256xi1>
    %114 = vector.broadcast %cst_55 : f32 to vector<4x256xf32>
    %115 = arith.select %113, %111, %114 : vector<4x256xi1>, vector<4x256xf32>
    %c20_56 = arith.constant 20 : index
    %c0_57 = arith.constant 0 : index
    %116 = vector.load %arg9[%c20_56, %c0_57] : memref<36x256xf32, #tpu.memory_space<vmem>>, vector<4x256xf32>
    tpu.vector_store %arg9[%c20_56, %c0_57], %115 {strides = array<i32>} : memref<36x256xf32, #tpu.memory_space<vmem>>, vector<4x256xf32>,
    %cst_58 = arith.constant 0.000000e+00 : f32
    %117 = vector.broadcast %cst_58 : f32 to vector<4x15xf32>
    %118 = vector.extract_strided_slice %10 {offsets = [0, 15], sizes = [4, 241], strides = [1, 1]} : vector<4x256xf32> to vector<4x241xf32>
    %119 = tpu.concatenate %118, %117 in 1 : vector<4x241xf32>, vector<4x15xf32> -> vector<4x256xf32>
    %cst_59 = arith.constant 0.000000e+00 : f32
    %120 = vector.shape_cast %4 : vector<1x256xi1> to vector<1x256xi1>
    %121 = vector.broadcast %120 : vector<1x256xi1> to vector<4x256xi1>
    %122 = vector.broadcast %cst_59 : f32 to vector<4x256xf32>
    %123 = arith.select %121, %119, %122 : vector<4x256xi1>, vector<4x256xf32>
    %c24_60 = arith.constant 24 : index
    %c0_61 = arith.constant 0 : index
    %124 = vector.load %arg9[%c24_60, %c0_61] : memref<36x256xf32, #tpu.memory_space<vmem>>, vector<4x256xf32>
    tpu.vector_store %arg9[%c24_60, %c0_61], %123 {strides = array<i32>} : memref<36x256xf32, #tpu.memory_space<vmem>>, vector<4x256xf32>,
    %cst_62 = arith.constant 0.000000e+00 : f32
    %125 = vector.broadcast %cst_62 : f32 to vector<4x16xf32>
    %126 = vector.extract_strided_slice %10 {offsets = [0, 16], sizes = [4, 240], strides = [1, 1]} : vector<4x256xf32> to vector<4x240xf32>
    %127 = tpu.concatenate %126, %125 in 1 : vector<4x240xf32>, vector<4x16xf32> -> vector<4x256xf32>
    %c28_63 = arith.constant 28 : index
    %c0_64 = arith.constant 0 : index
    %128 = vector.load %arg9[%c28_63, %c0_64] : memref<36x256xf32, #tpu.memory_space<vmem>>, vector<4x256xf32>
    tpu.vector_store %arg9[%c28_63, %c0_64], %127 {strides = array<i32>} : memref<36x256xf32, #tpu.memory_space<vmem>>, vector<4x256xf32>,
    %cst_65 = arith.constant 0.000000e+00 : f32
    %129 = vector.broadcast %cst_65 : f32 to vector<4x17xf32>
    %130 = vector.extract_strided_slice %10 {offsets = [0, 17], sizes = [4, 239], strides = [1, 1]} : vector<4x256xf32> to vector<4x239xf32>
    %131 = tpu.concatenate %130, %129 in 1 : vector<4x239xf32>, vector<4x17xf32> -> vector<4x256xf32>
    %cst_66 = arith.constant 0.000000e+00 : f32
    %132 = vector.shape_cast %6 : vector<1x256xi1> to vector<1x256xi1>
    %133 = vector.broadcast %132 : vector<1x256xi1> to vector<4x256xi1>
    %134 = vector.broadcast %cst_66 : f32 to vector<4x256xf32>
    %135 = arith.select %133, %131, %134 : vector<4x256xi1>, vector<4x256xf32>
    %c32_67 = arith.constant 32 : index
    %c0_68 = arith.constant 0 : index
    %136 = vector.load %arg9[%c32_67, %c0_68] : memref<36x256xf32, #tpu.memory_space<vmem>>, vector<4x256xf32>
    tpu.vector_store %arg9[%c32_67, %c0_68], %135 {strides = array<i32>} : memref<36x256xf32, #tpu.memory_space<vmem>>, vector<4x256xf32>,
    %c0_69 = arith.constant 0 : index
    %c0_70 = arith.constant 0 : index
    %137 = vector.load %arg9[%c0_69, %c0_70] : memref<36x256xf32, #tpu.memory_space<vmem>>, vector<36x256xf32>
    %cst_71 = arith.constant dense<0.000000e+00> : vector<8x256xf32>
    %138 = tpu.matmul %11, %137, %cst_71 {dimension_numbers = #tpu.dot_dimension_numbers<[1], [0], [0], [1], [0, 0, 1, 1], [], []>} : vector<8x36xf32>, vector<36x256xf32>, vector<8x256xf32> -> vector<8x256xf32>
    %cst_72 = arith.constant dense<0.000000e+00> : vector<8xf32>
    %139 = vector.multi_reduction <add>, %138, %cst_72 [1] : vector<8x256xf32> to vector<8xf32>
    %140 = vector.shape_cast %139 : vector<8xf32> to vector<8x1xf32>
    %141 = arith.addf %75, %140 : vector<8x1xf32>
    %142 = arith.mulf %138, %138 : vector<8x256xf32>
    %cst_73 = arith.constant dense<0.000000e+00> : vector<8xf32>
    %143 = vector.multi_reduction <add>, %142, %cst_73 [1] : vector<8x256xf32> to vector<8xf32>
    %144 = vector.shape_cast %143 : vector<8xf32> to vector<8x1xf32>
    %145 = arith.addf %79, %144 : vector<8x1xf32>
    %cst_74 = arith.constant 0.001953125 : f32
    %146 = vector.broadcast %cst_74 : f32 to vector<8x1xf32>
    %147 = arith.mulf %141, %146 : vector<8x1xf32>
    %cst_75 = arith.constant 0.001953125 : f32
    %148 = vector.broadcast %cst_75 : f32 to vector<8x1xf32>
    %149 = arith.mulf %145, %148 : vector<8x1xf32>
    %150 = arith.mulf %147, %147 : vector<8x1xf32>
    %151 = arith.subf %149, %150 : vector<8x1xf32>
    %c0_76 = arith.constant 0 : index
    %c0_77 = arith.constant 0 : index
    %152 = vector.load %arg3[%c0_76, %c0_77] : memref<8x1xf32, #tpu.memory_space<vmem>>, vector<8x1xf32>
    %cst_78 = arith.constant 9.99999974E-6 : f32
    %153 = vector.broadcast %cst_78 : f32 to vector<8x1xf32>
    %154 = arith.addf %151, %153 : vector<8x1xf32>
    %155 = math.rsqrt %154 : vector<8x1xf32>
    %156 = arith.mulf %152, %155 : vector<8x1xf32>
    %c0_79 = arith.constant 0 : index
    %c0_80 = arith.constant 0 : index
    %157 = vector.load %arg4[%c0_79, %c0_80] : memref<8x1xf32, #tpu.memory_space<vmem>>, vector<8x1xf32>
    %158 = arith.mulf %147, %156 : vector<8x1xf32>
    %159 = arith.subf %157, %158 : vector<8x1xf32>
    %160 = vector.broadcast %156 : vector<8x1xf32> to vector<8x256xf32>
    %161 = arith.mulf %72, %160 : vector<8x256xf32>
    %162 = vector.broadcast %159 : vector<8x1xf32> to vector<8x256xf32>
    %163 = arith.addf %161, %162 : vector<8x256xf32>
    %cst_81 = arith.constant 0.000000e+00 : f32
    %164 = vector.broadcast %cst_81 : f32 to vector<8x256xf32>
    %165 = arith.maximumf %163, %164 : vector<8x256xf32>
    %166 = vector.broadcast %156 : vector<8x1xf32> to vector<8x256xf32>
    %167 = arith.mulf %138, %166 : vector<8x256xf32>
    %168 = vector.broadcast %159 : vector<8x1xf32> to vector<8x256xf32>
    %169 = arith.addf %167, %168 : vector<8x256xf32>
    %cst_82 = arith.constant 0.000000e+00 : f32
    %170 = vector.broadcast %cst_82 : f32 to vector<8x256xf32>
    %171 = arith.maximumf %169, %170 : vector<8x256xf32>
    %c0_83 = arith.constant 0 : index
    %c0_84 = arith.constant 0 : index
    %172 = vector.load %arg5[%c0_83, %c0_84] : memref<8x72xf32, #tpu.memory_space<vmem>>, vector<8x72xf32>
    %cst_85 = arith.constant 0.000000e+00 : f32
    %173 = vector.broadcast %cst_85 : f32 to vector<8x1xf32>
    %cst_86 = arith.constant 0.000000e+00 : f32
    %174 = vector.broadcast %cst_86 : f32 to vector<8x1xf32>
    %cst_87 = arith.constant 0.000000e+00 : f32
    %175 = vector.broadcast %cst_87 : f32 to vector<8x17xf32>
    %176 = vector.extract_strided_slice %165 {offsets = [0, 0], sizes = [8, 239], strides = [1, 1]} : vector<8x256xf32> to vector<8x239xf32>
    %177 = tpu.concatenate %175, %176 in 1 : vector<8x17xf32>, vector<8x239xf32> -> vector<8x256xf32>
    %cst_88 = arith.constant 0.000000e+00 : f32
    %178 = vector.shape_cast %4 : vector<1x256xi1> to vector<1x256xi1>
    %179 = vector.broadcast %178 : vector<1x256xi1> to vector<8x256xi1>
    %180 = vector.broadcast %cst_88 : f32 to vector<8x256xf32>
    %181 = arith.select %179, %177, %180 : vector<8x256xi1>, vector<8x256xf32>
    %c0_89 = arith.constant 0 : index
    %c0_90 = arith.constant 0 : index
    %182 = vector.load %arg10[%c0_89, %c0_90] : memref<72x256xf32, #tpu.memory_space<vmem>>, vector<8x256xf32>
    tpu.vector_store %arg10[%c0_89, %c0_90], %181 {strides = array<i32>} : memref<72x256xf32, #tpu.memory_space<vmem>>, vector<8x256xf32>,
    %cst_91 = arith.constant 0.000000e+00 : f32
    %183 = vector.broadcast %cst_91 : f32 to vector<8x16xf32>
    %184 = vector.extract_strided_slice %165 {offsets = [0, 0], sizes = [8, 240], strides = [1, 1]} : vector<8x256xf32> to vector<8x240xf32>
    %185 = tpu.concatenate %183, %184 in 1 : vector<8x16xf32>, vector<8x240xf32> -> vector<8x256xf32>
    %c8_92 = arith.constant 8 : index
    %c0_93 = arith.constant 0 : index
    %186 = vector.load %arg10[%c8_92, %c0_93] : memref<72x256xf32, #tpu.memory_space<vmem>>, vector<8x256xf32>
    tpu.vector_store %arg10[%c8_92, %c0_93], %185 {strides = array<i32>} : memref<72x256xf32, #tpu.memory_space<vmem>>, vector<8x256xf32>,
    %cst_94 = arith.constant 0.000000e+00 : f32
    %187 = vector.broadcast %cst_94 : f32 to vector<8x15xf32>
    %188 = vector.extract_strided_slice %165 {offsets = [0, 0], sizes = [8, 241], strides = [1, 1]} : vector<8x256xf32> to vector<8x241xf32>
    %189 = tpu.concatenate %187, %188 in 1 : vector<8x15xf32>, vector<8x241xf32> -> vector<8x256xf32>
    %cst_95 = arith.constant 0.000000e+00 : f32
    %190 = vector.shape_cast %6 : vector<1x256xi1> to vector<1x256xi1>
    %191 = vector.broadcast %190 : vector<1x256xi1> to vector<8x256xi1>
    %192 = vector.broadcast %cst_95 : f32 to vector<8x256xf32>
    %193 = arith.select %191, %189, %192 : vector<8x256xi1>, vector<8x256xf32>
    %c16_96 = arith.constant 16 : index
    %c0_97 = arith.constant 0 : index
    %194 = vector.load %arg10[%c16_96, %c0_97] : memref<72x256xf32, #tpu.memory_space<vmem>>, vector<8x256xf32>
    tpu.vector_store %arg10[%c16_96, %c0_97], %193 {strides = array<i32>} : memref<72x256xf32, #tpu.memory_space<vmem>>, vector<8x256xf32>,
    %cst_98 = arith.constant 0.000000e+00 : f32
    %195 = vector.broadcast %cst_98 : f32 to vector<8x1xf32>
    %196 = vector.extract_strided_slice %165 {offsets = [0, 0], sizes = [8, 255], strides = [1, 1]} : vector<8x256xf32> to vector<8x255xf32>
    %197 = tpu.concatenate %195, %196 in 1 : vector<8x1xf32>, vector<8x255xf32> -> vector<8x256xf32>
    %cst_99 = arith.constant 0.000000e+00 : f32
    %198 = vector.shape_cast %4 : vector<1x256xi1> to vector<1x256xi1>
    %199 = vector.broadcast %198 : vector<1x256xi1> to vector<8x256xi1>
    %200 = vector.broadcast %cst_99 : f32 to vector<8x256xf32>
    %201 = arith.select %199, %197, %200 : vector<8x256xi1>, vector<8x256xf32>
    %c24_100 = arith.constant 24 : index
    %c0_101 = arith.constant 0 : index
    %202 = vector.load %arg10[%c24_100, %c0_101] : memref<72x256xf32, #tpu.memory_space<vmem>>, vector<8x256xf32>
    tpu.vector_store %arg10[%c24_100, %c0_101], %201 {strides = array<i32>} : memref<72x256xf32, #tpu.memory_space<vmem>>, vector<8x256xf32>,
    %c32_102 = arith.constant 32 : index
    %c0_103 = arith.constant 0 : index
    %203 = vector.load %arg10[%c32_102, %c0_103] : memref<72x256xf32, #tpu.memory_space<vmem>>, vector<8x256xf32>
    tpu.vector_store %arg10[%c32_102, %c0_103], %165 {strides = array<i32>} : memref<72x256xf32, #tpu.memory_space<vmem>>, vector<8x256xf32>,
    %cst_104 = arith.constant 0.000000e+00 : f32
    %204 = vector.broadcast %cst_104 : f32 to vector<8x1xf32>
    %205 = vector.extract_strided_slice %165 {offsets = [0, 1], sizes = [8, 255], strides = [1, 1]} : vector<8x256xf32> to vector<8x255xf32>
    %206 = tpu.concatenate %205, %204 in 1 : vector<8x255xf32>, vector<8x1xf32> -> vector<8x256xf32>
    %cst_105 = arith.constant 0.000000e+00 : f32
    %207 = vector.shape_cast %6 : vector<1x256xi1> to vector<1x256xi1>
    %208 = vector.broadcast %207 : vector<1x256xi1> to vector<8x256xi1>
    %209 = vector.broadcast %cst_105 : f32 to vector<8x256xf32>
    %210 = arith.select %208, %206, %209 : vector<8x256xi1>, vector<8x256xf32>
    %c40 = arith.constant 40 : index
    %c0_106 = arith.constant 0 : index
    %211 = vector.load %arg10[%c40, %c0_106] : memref<72x256xf32, #tpu.memory_space<vmem>>, vector<8x256xf32>
    tpu.vector_store %arg10[%c40, %c0_106], %210 {strides = array<i32>} : memref<72x256xf32, #tpu.memory_space<vmem>>, vector<8x256xf32>,
    %cst_107 = arith.constant 0.000000e+00 : f32
    %212 = vector.broadcast %cst_107 : f32 to vector<8x15xf32>
    %213 = vector.extract_strided_slice %165 {offsets = [0, 15], sizes = [8, 241], strides = [1, 1]} : vector<8x256xf32> to vector<8x241xf32>
    %214 = tpu.concatenate %213, %212 in 1 : vector<8x241xf32>, vector<8x15xf32> -> vector<8x256xf32>
    %cst_108 = arith.constant 0.000000e+00 : f32
    %215 = vector.shape_cast %4 : vector<1x256xi1> to vector<1x256xi1>
    %216 = vector.broadcast %215 : vector<1x256xi1> to vector<8x256xi1>
    %217 = vector.broadcast %cst_108 : f32 to vector<8x256xf32>
    %218 = arith.select %216, %214, %217 : vector<8x256xi1>, vector<8x256xf32>
    %c48 = arith.constant 48 : index
    %c0_109 = arith.constant 0 : index
    %219 = vector.load %arg10[%c48, %c0_109] : memref<72x256xf32, #tpu.memory_space<vmem>>, vector<8x256xf32>
    tpu.vector_store %arg10[%c48, %c0_109], %218 {strides = array<i32>} : memref<72x256xf32, #tpu.memory_space<vmem>>, vector<8x256xf32>,
    %cst_110 = arith.constant 0.000000e+00 : f32
    %220 = vector.broadcast %cst_110 : f32 to vector<8x16xf32>
    %221 = vector.extract_strided_slice %165 {offsets = [0, 16], sizes = [8, 240], strides = [1, 1]} : vector<8x256xf32> to vector<8x240xf32>
    %222 = tpu.concatenate %221, %220 in 1 : vector<8x240xf32>, vector<8x16xf32> -> vector<8x256xf32>
    %c56 = arith.constant 56 : index
    %c0_111 = arith.constant 0 : index
    %223 = vector.load %arg10[%c56, %c0_111] : memref<72x256xf32, #tpu.memory_space<vmem>>, vector<8x256xf32>
    tpu.vector_store %arg10[%c56, %c0_111], %222 {strides = array<i32>} : memref<72x256xf32, #tpu.memory_space<vmem>>, vector<8x256xf32>,
    %cst_112 = arith.constant 0.000000e+00 : f32
    %224 = vector.broadcast %cst_112 : f32 to vector<8x17xf32>
    %225 = vector.extract_strided_slice %165 {offsets = [0, 17], sizes = [8, 239], strides = [1, 1]} : vector<8x256xf32> to vector<8x239xf32>
    %226 = tpu.concatenate %225, %224 in 1 : vector<8x239xf32>, vector<8x17xf32> -> vector<8x256xf32>
    %cst_113 = arith.constant 0.000000e+00 : f32
    %227 = vector.shape_cast %6 : vector<1x256xi1> to vector<1x256xi1>
    %228 = vector.broadcast %227 : vector<1x256xi1> to vector<8x256xi1>
    %229 = vector.broadcast %cst_113 : f32 to vector<8x256xf32>
    %230 = arith.select %228, %226, %229 : vector<8x256xi1>, vector<8x256xf32>
    %c64 = arith.constant 64 : index
    %c0_114 = arith.constant 0 : index
    %231 = vector.load %arg10[%c64, %c0_114] : memref<72x256xf32, #tpu.memory_space<vmem>>, vector<8x256xf32>
    tpu.vector_store %arg10[%c64, %c0_114], %230 {strides = array<i32>} : memref<72x256xf32, #tpu.memory_space<vmem>>, vector<8x256xf32>,
    %c0_115 = arith.constant 0 : index
    %c0_116 = arith.constant 0 : index
    %232 = vector.load %arg10[%c0_115, %c0_116] : memref<72x256xf32, #tpu.memory_space<vmem>>, vector<72x256xf32>
    %cst_117 = arith.constant dense<0.000000e+00> : vector<8x256xf32>
    %233 = tpu.matmul %172, %232, %cst_117 {dimension_numbers = #tpu.dot_dimension_numbers<[1], [0], [0], [1], [0, 0, 1, 1], [], []>} : vector<8x72xf32>, vector<72x256xf32>, vector<8x256xf32> -> vector<8x256xf32>
    %cst_118 = arith.constant dense<0.000000e+00> : vector<8xf32>
    %234 = vector.multi_reduction <add>, %233, %cst_118 [1] : vector<8x256xf32> to vector<8xf32>
    %235 = vector.shape_cast %234 : vector<8xf32> to vector<8x1xf32>
    %236 = arith.addf %173, %235 : vector<8x1xf32>
    %237 = arith.mulf %233, %233 : vector<8x256xf32>
    %cst_119 = arith.constant dense<0.000000e+00> : vector<8xf32>
    %238 = vector.multi_reduction <add>, %237, %cst_119 [1] : vector<8x256xf32> to vector<8xf32>
    %239 = vector.shape_cast %238 : vector<8xf32> to vector<8x1xf32>
    %240 = arith.addf %174, %239 : vector<8x1xf32>
    %cst_120 = arith.constant 0.000000e+00 : f32
    %241 = vector.broadcast %cst_120 : f32 to vector<8x17xf32>
    %242 = vector.extract_strided_slice %171 {offsets = [0, 0], sizes = [8, 239], strides = [1, 1]} : vector<8x256xf32> to vector<8x239xf32>
    %243 = tpu.concatenate %241, %242 in 1 : vector<8x17xf32>, vector<8x239xf32> -> vector<8x256xf32>
    %cst_121 = arith.constant 0.000000e+00 : f32
    %244 = vector.shape_cast %4 : vector<1x256xi1> to vector<1x256xi1>
    %245 = vector.broadcast %244 : vector<1x256xi1> to vector<8x256xi1>
    %246 = vector.broadcast %cst_121 : f32 to vector<8x256xf32>
    %247 = arith.select %245, %243, %246 : vector<8x256xi1>, vector<8x256xf32>
    %c0_122 = arith.constant 0 : index
    %c0_123 = arith.constant 0 : index
    %248 = vector.load %arg10[%c0_122, %c0_123] : memref<72x256xf32, #tpu.memory_space<vmem>>, vector<8x256xf32>
    tpu.vector_store %arg10[%c0_122, %c0_123], %247 {strides = array<i32>} : memref<72x256xf32, #tpu.memory_space<vmem>>, vector<8x256xf32>,
    %cst_124 = arith.constant 0.000000e+00 : f32
    %249 = vector.broadcast %cst_124 : f32 to vector<8x16xf32>
    %250 = vector.extract_strided_slice %171 {offsets = [0, 0], sizes = [8, 240], strides = [1, 1]} : vector<8x256xf32> to vector<8x240xf32>
    %251 = tpu.concatenate %249, %250 in 1 : vector<8x16xf32>, vector<8x240xf32> -> vector<8x256xf32>
    %c8_125 = arith.constant 8 : index
    %c0_126 = arith.constant 0 : index
    %252 = vector.load %arg10[%c8_125, %c0_126] : memref<72x256xf32, #tpu.memory_space<vmem>>, vector<8x256xf32>
    tpu.vector_store %arg10[%c8_125, %c0_126], %251 {strides = array<i32>} : memref<72x256xf32, #tpu.memory_space<vmem>>, vector<8x256xf32>,
    %cst_127 = arith.constant 0.000000e+00 : f32
    %253 = vector.broadcast %cst_127 : f32 to vector<8x15xf32>
    %254 = vector.extract_strided_slice %171 {offsets = [0, 0], sizes = [8, 241], strides = [1, 1]} : vector<8x256xf32> to vector<8x241xf32>
    %255 = tpu.concatenate %253, %254 in 1 : vector<8x15xf32>, vector<8x241xf32> -> vector<8x256xf32>
    %cst_128 = arith.constant 0.000000e+00 : f32
    %256 = vector.shape_cast %6 : vector<1x256xi1> to vector<1x256xi1>
    %257 = vector.broadcast %256 : vector<1x256xi1> to vector<8x256xi1>
    %258 = vector.broadcast %cst_128 : f32 to vector<8x256xf32>
    %259 = arith.select %257, %255, %258 : vector<8x256xi1>, vector<8x256xf32>
    %c16_129 = arith.constant 16 : index
    %c0_130 = arith.constant 0 : index
    %260 = vector.load %arg10[%c16_129, %c0_130] : memref<72x256xf32, #tpu.memory_space<vmem>>, vector<8x256xf32>
    tpu.vector_store %arg10[%c16_129, %c0_130], %259 {strides = array<i32>} : memref<72x256xf32, #tpu.memory_space<vmem>>, vector<8x256xf32>,
    %cst_131 = arith.constant 0.000000e+00 : f32
    %261 = vector.broadcast %cst_131 : f32 to vector<8x1xf32>
    %262 = vector.extract_strided_slice %171 {offsets = [0, 0], sizes = [8, 255], strides = [1, 1]} : vector<8x256xf32> to vector<8x255xf32>
    %263 = tpu.concatenate %261, %262 in 1 : vector<8x1xf32>, vector<8x255xf32> -> vector<8x256xf32>
    %cst_132 = arith.constant 0.000000e+00 : f32
    %264 = vector.shape_cast %4 : vector<1x256xi1> to vector<1x256xi1>
    %265 = vector.broadcast %264 : vector<1x256xi1> to vector<8x256xi1>
    %266 = vector.broadcast %cst_132 : f32 to vector<8x256xf32>
    %267 = arith.select %265, %263, %266 : vector<8x256xi1>, vector<8x256xf32>
    %c24_133 = arith.constant 24 : index
    %c0_134 = arith.constant 0 : index
    %268 = vector.load %arg10[%c24_133, %c0_134] : memref<72x256xf32, #tpu.memory_space<vmem>>, vector<8x256xf32>
    tpu.vector_store %arg10[%c24_133, %c0_134], %267 {strides = array<i32>} : memref<72x256xf32, #tpu.memory_space<vmem>>, vector<8x256xf32>,
    %c32_135 = arith.constant 32 : index
    %c0_136 = arith.constant 0 : index
    %269 = vector.load %arg10[%c32_135, %c0_136] : memref<72x256xf32, #tpu.memory_space<vmem>>, vector<8x256xf32>
    tpu.vector_store %arg10[%c32_135, %c0_136], %171 {strides = array<i32>} : memref<72x256xf32, #tpu.memory_space<vmem>>, vector<8x256xf32>,
    %cst_137 = arith.constant 0.000000e+00 : f32
    %270 = vector.broadcast %cst_137 : f32 to vector<8x1xf32>
    %271 = vector.extract_strided_slice %171 {offsets = [0, 1], sizes = [8, 255], strides = [1, 1]} : vector<8x256xf32> to vector<8x255xf32>
    %272 = tpu.concatenate %271, %270 in 1 : vector<8x255xf32>, vector<8x1xf32> -> vector<8x256xf32>
    %cst_138 = arith.constant 0.000000e+00 : f32
    %273 = vector.shape_cast %6 : vector<1x256xi1> to vector<1x256xi1>
    %274 = vector.broadcast %273 : vector<1x256xi1> to vector<8x256xi1>
    %275 = vector.broadcast %cst_138 : f32 to vector<8x256xf32>
    %276 = arith.select %274, %272, %275 : vector<8x256xi1>, vector<8x256xf32>
    %c40_139 = arith.constant 40 : index
    %c0_140 = arith.constant 0 : index
    %277 = vector.load %arg10[%c40_139, %c0_140] : memref<72x256xf32, #tpu.memory_space<vmem>>, vector<8x256xf32>
    tpu.vector_store %arg10[%c40_139, %c0_140], %276 {strides = array<i32>} : memref<72x256xf32, #tpu.memory_space<vmem>>, vector<8x256xf32>,
    %cst_141 = arith.constant 0.000000e+00 : f32
    %278 = vector.broadcast %cst_141 : f32 to vector<8x15xf32>
    %279 = vector.extract_strided_slice %171 {offsets = [0, 15], sizes = [8, 241], strides = [1, 1]} : vector<8x256xf32> to vector<8x241xf32>
    %280 = tpu.concatenate %279, %278 in 1 : vector<8x241xf32>, vector<8x15xf32> -> vector<8x256xf32>
    %cst_142 = arith.constant 0.000000e+00 : f32
    %281 = vector.shape_cast %4 : vector<1x256xi1> to vector<1x256xi1>
    %282 = vector.broadcast %281 : vector<1x256xi1> to vector<8x256xi1>
    %283 = vector.broadcast %cst_142 : f32 to vector<8x256xf32>
    %284 = arith.select %282, %280, %283 : vector<8x256xi1>, vector<8x256xf32>
    %c48_143 = arith.constant 48 : index
    %c0_144 = arith.constant 0 : index
    %285 = vector.load %arg10[%c48_143, %c0_144] : memref<72x256xf32, #tpu.memory_space<vmem>>, vector<8x256xf32>
    tpu.vector_store %arg10[%c48_143, %c0_144], %284 {strides = array<i32>} : memref<72x256xf32, #tpu.memory_space<vmem>>, vector<8x256xf32>,
    %cst_145 = arith.constant 0.000000e+00 : f32
    %286 = vector.broadcast %cst_145 : f32 to vector<8x16xf32>
    %287 = vector.extract_strided_slice %171 {offsets = [0, 16], sizes = [8, 240], strides = [1, 1]} : vector<8x256xf32> to vector<8x240xf32>
    %288 = tpu.concatenate %287, %286 in 1 : vector<8x240xf32>, vector<8x16xf32> -> vector<8x256xf32>
    %c56_146 = arith.constant 56 : index
    %c0_147 = arith.constant 0 : index
    %289 = vector.load %arg10[%c56_146, %c0_147] : memref<72x256xf32, #tpu.memory_space<vmem>>, vector<8x256xf32>
    tpu.vector_store %arg10[%c56_146, %c0_147], %288 {strides = array<i32>} : memref<72x256xf32, #tpu.memory_space<vmem>>, vector<8x256xf32>,
    %cst_148 = arith.constant 0.000000e+00 : f32
    %290 = vector.broadcast %cst_148 : f32 to vector<8x17xf32>
    %291 = vector.extract_strided_slice %171 {offsets = [0, 17], sizes = [8, 239], strides = [1, 1]} : vector<8x256xf32> to vector<8x239xf32>
    %292 = tpu.concatenate %291, %290 in 1 : vector<8x239xf32>, vector<8x17xf32> -> vector<8x256xf32>
    %cst_149 = arith.constant 0.000000e+00 : f32
    %293 = vector.shape_cast %6 : vector<1x256xi1> to vector<1x256xi1>
    %294 = vector.broadcast %293 : vector<1x256xi1> to vector<8x256xi1>
    %295 = vector.broadcast %cst_149 : f32 to vector<8x256xf32>
    %296 = arith.select %294, %292, %295 : vector<8x256xi1>, vector<8x256xf32>
    %c64_150 = arith.constant 64 : index
    %c0_151 = arith.constant 0 : index
    %297 = vector.load %arg10[%c64_150, %c0_151] : memref<72x256xf32, #tpu.memory_space<vmem>>, vector<8x256xf32>
    tpu.vector_store %arg10[%c64_150, %c0_151], %296 {strides = array<i32>} : memref<72x256xf32, #tpu.memory_space<vmem>>, vector<8x256xf32>,
    %c0_152 = arith.constant 0 : index
    %c0_153 = arith.constant 0 : index
    %298 = vector.load %arg10[%c0_152, %c0_153] : memref<72x256xf32, #tpu.memory_space<vmem>>, vector<72x256xf32>
    %cst_154 = arith.constant dense<0.000000e+00> : vector<8x256xf32>
    %299 = tpu.matmul %172, %298, %cst_154 {dimension_numbers = #tpu.dot_dimension_numbers<[1], [0], [0], [1], [0, 0, 1, 1], [], []>} : vector<8x72xf32>, vector<72x256xf32>, vector<8x256xf32> -> vector<8x256xf32>
    %cst_155 = arith.constant dense<0.000000e+00> : vector<8xf32>
    %300 = vector.multi_reduction <add>, %299, %cst_155 [1] : vector<8x256xf32> to vector<8xf32>
    %301 = vector.shape_cast %300 : vector<8xf32> to vector<8x1xf32>
    %302 = arith.addf %236, %301 : vector<8x1xf32>
    %303 = arith.mulf %299, %299 : vector<8x256xf32>
    %cst_156 = arith.constant dense<0.000000e+00> : vector<8xf32>
    %304 = vector.multi_reduction <add>, %303, %cst_156 [1] : vector<8x256xf32> to vector<8xf32>
    %305 = vector.shape_cast %304 : vector<8xf32> to vector<8x1xf32>
    %306 = arith.addf %240, %305 : vector<8x1xf32>
    %cst_157 = arith.constant 0.001953125 : f32
    %307 = vector.broadcast %cst_157 : f32 to vector<8x1xf32>
    %308 = arith.mulf %302, %307 : vector<8x1xf32>
    %cst_158 = arith.constant 0.001953125 : f32
    %309 = vector.broadcast %cst_158 : f32 to vector<8x1xf32>
    %310 = arith.mulf %306, %309 : vector<8x1xf32>
    %311 = arith.mulf %308, %308 : vector<8x1xf32>
    %312 = arith.subf %310, %311 : vector<8x1xf32>
    %c0_159 = arith.constant 0 : index
    %c0_160 = arith.constant 0 : index
    %313 = vector.load %arg6[%c0_159, %c0_160] : memref<8x1xf32, #tpu.memory_space<vmem>>, vector<8x1xf32>
    %cst_161 = arith.constant 9.99999974E-6 : f32
    %314 = vector.broadcast %cst_161 : f32 to vector<8x1xf32>
    %315 = arith.addf %312, %314 : vector<8x1xf32>
    %316 = math.rsqrt %315 : vector<8x1xf32>
    %317 = arith.mulf %313, %316 : vector<8x1xf32>
    %c0_162 = arith.constant 0 : index
    %c0_163 = arith.constant 0 : index
    %318 = vector.load %arg7[%c0_162, %c0_163] : memref<8x1xf32, #tpu.memory_space<vmem>>, vector<8x1xf32>
    %319 = arith.mulf %308, %317 : vector<8x1xf32>
    %320 = arith.subf %318, %319 : vector<8x1xf32>
    %321 = vector.broadcast %317 : vector<8x1xf32> to vector<8x256xf32>
    %322 = arith.mulf %233, %321 : vector<8x256xf32>
    %323 = vector.broadcast %320 : vector<8x1xf32> to vector<8x256xf32>
    %324 = arith.addf %322, %323 : vector<8x256xf32>
    %cst_164 = arith.constant 0.000000e+00 : f32
    %325 = vector.broadcast %cst_164 : f32 to vector<8x256xf32>
    %326 = arith.maximumf %324, %325 : vector<8x256xf32>
    %c0_165 = arith.constant 0 : index
    %c0_166 = arith.constant 0 : index
    %c0_167 = arith.constant 0 : index
    %327 = vector.load %arg8[%c0_165, %c0_166, %c0_167] : memref<2x8x256xf32, #tpu.memory_space<vmem>>, vector<1x8x256xf32>
    %328 = vector.shape_cast %327 : vector<1x8x256xf32> to vector<8x256xf32>
    %329 = vector.shape_cast %326 : vector<8x256xf32> to vector<1x8x256xf32>
    tpu.vector_store %arg8[%c0_165, %c0_166, %c0_167], %329 {strides = array<i32>} : memref<2x8x256xf32, #tpu.memory_space<vmem>>, vector<1x8x256xf32>,
    %330 = vector.broadcast %317 : vector<8x1xf32> to vector<8x256xf32>
    %331 = arith.mulf %299, %330 : vector<8x256xf32>
    %332 = vector.broadcast %320 : vector<8x1xf32> to vector<8x256xf32>
    %333 = arith.addf %331, %332 : vector<8x256xf32>
    %cst_168 = arith.constant 0.000000e+00 : f32
    %334 = vector.broadcast %cst_168 : f32 to vector<8x256xf32>
    %335 = arith.maximumf %333, %334 : vector<8x256xf32>
    %c1_169 = arith.constant 1 : index
    %c0_170 = arith.constant 0 : index
    %c0_171 = arith.constant 0 : index
    %336 = vector.load %arg8[%c1_169, %c0_170, %c0_171] : memref<2x8x256xf32, #tpu.memory_space<vmem>>, vector<1x8x256xf32>
    %337 = vector.shape_cast %336 : vector<1x8x256xf32> to vector<8x256xf32>
    %338 = vector.shape_cast %335 : vector<8x256xf32> to vector<1x8x256xf32>
    tpu.vector_store %arg8[%c1_169, %c0_170, %c0_171], %338 {strides = array<i32>} : memref<2x8x256xf32, #tpu.memory_space<vmem>>, vector<1x8x256xf32>,
    return
  }
  func.func @transform_0(%arg0: i32) -> (i32, i32, i32) {
    %c0_i32 = arith.constant 0 : i32
    %c0_i32_0 = arith.constant 0 : i32
    %c0_i32_1 = arith.constant 0 : i32
    %c0_i32_2 = arith.constant 0 : i32
    return %c0_i32, %c0_i32_0, %c0_i32_1 : i32, i32, i32
  }
  func.func @transform_1(%arg0: i32) -> (i32, i32) {
    %c0_i32 = arith.constant 0 : i32
    %c0_i32_0 = arith.constant 0 : i32
    %c0_i32_1 = arith.constant 0 : i32
    return %c0_i32, %c0_i32_0 : i32, i32
  }
  func.func @transform_2(%arg0: i32) -> (i32, i32) {
    %c0_i32 = arith.constant 0 : i32
    %c0_i32_0 = arith.constant 0 : i32
    %c0_i32_1 = arith.constant 0 : i32
    return %c0_i32, %c0_i32_0 : i32, i32
  }
  func.func @transform_3(%arg0: i32) -> (i32, i32) {
    %c0_i32 = arith.constant 0 : i32
    %c0_i32_0 = arith.constant 0 : i32
    %c0_i32_1 = arith.constant 0 : i32
    return %c0_i32, %c0_i32_0 : i32, i32
  }
  func.func @transform_4(%arg0: i32) -> (i32, i32) {
    %c0_i32 = arith.constant 0 : i32
    %c0_i32_0 = arith.constant 0 : i32
    %c0_i32_1 = arith.constant 0 : i32
    return %c0_i32, %c0_i32_0 : i32, i32
  }
  func.func @transform_5(%arg0: i32) -> (i32, i32) {
    %c0_i32 = arith.constant 0 : i32
    %c0_i32_0 = arith.constant 0 : i32
    %c0_i32_1 = arith.constant 0 : i32
    return %c0_i32, %c0_i32_0 : i32, i32
  }
  func.func @transform_6(%arg0: i32) -> (i32, i32) {
    %c0_i32 = arith.constant 0 : i32
    %c0_i32_0 = arith.constant 0 : i32
    %c0_i32_1 = arith.constant 0 : i32
    return %c0_i32, %c0_i32_0 : i32, i32
  }
  func.func @transform_7(%arg0: i32) -> (i32, i32, i32) {
    %c0_i32 = arith.constant 0 : i32
    %c0_i32_0 = arith.constant 0 : i32
    %c0_i32_1 = arith.constant 0 : i32
    %c0_i32_2 = arith.constant 0 : i32
    return %c0_i32, %c0_i32_0, %c0_i32_1 : i32, i32, i32
  }
}

</mosaic_0001>

<llo_original>
// kernel: tpu_custom_call.1
$region0: #{tpu_custom_call.1}
  #allocation0 [shape = 'u32[]', space=smem, size = 0x4, offset = 0x4, fixed_abs, tag = 'smem constant byte address 0x4 - core index']
  #allocation1 [shape = 'u32[72,128]{1,0:T(1,128)}', space=vmem, size = 0x9000, scoped, tag = 'internal scratch']
  #allocation2 [shape = 'f32[36,256]{1,0:T(8,128)}', space=vmem, size = 0xa000, scoped, tag = 'scratch operand']
  #allocation3 [shape = 'f32[72,256]{1,0:T(8,128)}', space=vmem, size = 0x12000, scoped, tag = 'scratch operand']
  %s0 = inlined_call_operand.vmem [shape: f32[2,4,256], index: 0, kind: input, shape index: {}]
  %s1 = inlined_call_operand.vmem [shape: f32[8,36], index: 1, kind: input, shape index: {}]
  %s2 = inlined_call_operand.vmem [shape: f32[8,1], index: 2, kind: input, shape index: {}]
  %s3 = inlined_call_operand.vmem [shape: f32[8,1], index: 3, kind: input, shape index: {}]
  %s4 = inlined_call_operand.vmem [shape: f32[8,72], index: 4, kind: input, shape index: {}]
  %s5 = inlined_call_operand.vmem [shape: f32[8,1], index: 5, kind: input, shape index: {}]
  %s6 = inlined_call_operand.vmem [shape: f32[8,1], index: 6, kind: input, shape index: {}]
  %s7 = inlined_call_operand.hbm [shape: f32[2,8,256], index: 7, kind: output, shape index: {}]
  %s8 = sld [smem:[#allocation0]]
  $region38: #{tpu_custom_call.1} parent=0
    _
  %s10 = ssub.s32 1, %s8
  %s11 = scalar_select 0, %s10, %s8
  $region1: #{tpu_custom_call.1} parent=0
    #allocation4 [shape = 'u8[16384]{0}', space=vmem, size = 0x4000, scoped, tag = 'output window, operand 0, single buffered']
    #allocation5 [shape = 's32[1]{0}', space=sflag, size = 0x4, scoped, tag = 'scoped memory for tpu_custom_call.1']
    %12 = vsyncpa [#allocation5], 0
    // Predicated region
    $region2: #{tpu_custom_call.1} parent=1 // pred_check
      _
    $region3: #{tpu_custom_call.1} parent=1 // pred_check_branch
      %14 = sbr.rel (0) target = $region5
    $region4: #{tpu_custom_call.1} parent=1 // pred_region
      _
    $region5: #{tpu_custom_call.1} parent=1 // pred_fallthru
      _
    // Predicated region
    $region6: #{tpu_custom_call.1} parent=1 // pred_check
      _
    $region7: #{tpu_custom_call.1} parent=1 // pred_check_branch
      %16 = sbr.rel (0) target = $region9
    $region8: #{tpu_custom_call.1} parent=1 // pred_region
      _
    $region9: #{tpu_custom_call.1} parent=1 // pred_fallthru
      _
    // Predicated region
    $region10: #{tpu_custom_call.1} parent=1 // pred_check
      _
    $region11: #{tpu_custom_call.1} parent=1 // pred_check_branch
      %18 = sbr.rel (0) target = $region13
    $region12: #{tpu_custom_call.1} parent=1 // pred_region
      _
    $region13: #{tpu_custom_call.1} parent=1 // pred_fallthru
      _
    // Predicated region
    $region14: #{tpu_custom_call.1} parent=1 // pred_check
      _
    $region15: #{tpu_custom_call.1} parent=1 // pred_check_branch
      %20 = sbr.rel (0) target = $region17
    $region16: #{tpu_custom_call.1} parent=1 // pred_region
      _
    $region17: #{tpu_custom_call.1} parent=1 // pred_fallthru
      _
    // Predicated region
    $region18: #{tpu_custom_call.1} parent=1 // pred_check
      _
    $region19: #{tpu_custom_call.1} parent=1 // pred_check_branch
      %22 = sbr.rel (0) target = $region21
    $region20: #{tpu_custom_call.1} parent=1 // pred_region
      _
    $region21: #{tpu_custom_call.1} parent=1 // pred_fallthru
      _
    // Predicated region
    $region22: #{tpu_custom_call.1} parent=1 // pred_check
      _
    $region23: #{tpu_custom_call.1} parent=1 // pred_check_branch
      %24 = sbr.rel (0) target = $region25
    $region24: #{tpu_custom_call.1} parent=1 // pred_region
      _
    $region25: #{tpu_custom_call.1} parent=1 // pred_fallthru
      _
    // Predicated region
    $region26: #{tpu_custom_call.1} parent=1 // pred_check
      _
    $region27: #{tpu_custom_call.1} parent=1 // pred_check_branch
      %26 = sbr.rel (0) target = $region29
    $region28: #{tpu_custom_call.1} parent=1 // pred_region
      _
    $region29: #{tpu_custom_call.1} parent=1 // pred_fallthru
      _
    %v27 = vlaneseq
    %v28 = vand.u32 %v27, 127
    %v29 = vadd.s32 %v28, 128
    %v30 = vand.u32 %v28, 15
    %v31 = vand.u32 %v29, 15
    %vm32 = vcmp.ne.s32.totalorder %v30, 0
    %vm33 = vcmp.ne.s32.totalorder %v31, 0
    %vm34 = vcmp.ne.s32.totalorder %v30, 15
    %vm35 = vcmp.ne.s32.totalorder %v31, 15
    %v36 = vld [vmem:[%s0] sm:$0xff]
    %s37 = scalar_lea.vmem %s0, 8
    %v38 = vld [vmem:[%s37] sm:$0xff]
    %v39 = vld [vmem:[%s1] sm:$0xff]
    %41 = vst [vmem:[#allocation1] ss:$2 sm:$0xff] %v36
    %v42 = vld.sshfl [vmem:[#allocation1] sm:$0xff pattern:$0x75316420]
    %v43 = vld.sshfl [vmem:[#allocation1 + $0x8] sm:$0xff pattern:$0x75316420]
    %44 = vrot.lane.b32.xlu0 %v42, 17
    %v45 = vpop.permute.xlu0 %44
    %46 = vrot.lane.b32.xlu0 %v43, 17
    %v47 = vpop.permute.xlu0 %46
    %vm48 = vcmask 138240
    %v49 = vsel %vm48, %v45, %v47
    %v52 = vsel %vm48, 0.0, %v45
    %v53 = vsel %vm32, 1, 0
    %v54 = vsel %vm33, 1, 0
    %vm55 = vcmp.eq.s32.totalorder %v53, 1
    %vm56 = vcmp.eq.s32.totalorder %v54, 1
    %v57 = vsel %vm55, %v52, 0.0
    %v58 = vsel %vm56, %v49, 0.0
    %59 = vst [vmem:[#allocation2] sm:$0xf] %v57
    %60 = vst [vmem:[#allocation2 + $0x8] sm:$0xf] %v58
    %61 = vst [vmem:[#allocation1] ss:$2 sm:$0xff] %v36
    %v62 = vld.sshfl [vmem:[#allocation1] sm:$0xff pattern:$0x75316420]
    %v63 = vld.sshfl [vmem:[#allocation1 + $0x8] sm:$0xff pattern:$0x75316420]
    %64 = vrot.lane.b32.xlu0 %v62, 16
    %v65 = vpop.permute.xlu0 %64
    %66 = vrot.lane.b32.xlu0 %v63, 16
    %v67 = vpop.permute.xlu0 %66
    %vm68 = vcmask 130048
    %v69 = vsel %vm68, %v65, %v67
    %v71 = vsel %vm68, 0.0, %v65
    %v73 = vrot.slane %v71, 4
    %v74 = vrot.slane %v69, 4
    %77 = vst [vmem:[#allocation2] sm:$0xf0] %v73
    %78 = vst [vmem:[#allocation2 + $0x8] sm:$0xf0] %v74
    %79 = vst [vmem:[#allocation1] ss:$2 sm:$0xff] %v36
    %v80 = vld.sshfl [vmem:[#allocation1] sm:$0xff pattern:$0x75316420]
    %v81 = vld.sshfl [vmem:[#allocation1 + $0x8] sm:$0xff pattern:$0x75316420]
    %82 = vrot.lane.b32.xlu0 %v80, 15
    %v83 = vpop.permute.xlu0 %82
    %84 = vrot.lane.b32.xlu0 %v81, 15
    %v85 = vpop.permute.xlu0 %84
    %vm86 = vcmask 121856
    %v87 = vsel %vm86, %v83, %v85
    %v90 = vsel %vm86, 0.0, %v83
    %v91 = vsel %vm34, 1, 0
    %v92 = vsel %vm35, 1, 0
    %vm93 = vcmp.eq.s32.totalorder %v91, 1
    %vm94 = vcmp.eq.s32.totalorder %v92, 1
    %v95 = vsel %vm93, %v90, 0.0
    %v96 = vsel %vm94, %v87, 0.0
    %97 = vst [vmem:[#allocation2 + $0x10] sm:$0xf] %v95
    %98 = vst [vmem:[#allocation2 + $0x18] sm:$0xf] %v96
    %99 = vst [vmem:[#allocation1] ss:$2 sm:$0xff] %v36
    %v100 = vld.sshfl [vmem:[#allocation1] sm:$0xff pattern:$0x75316420]
    %v101 = vld.sshfl [vmem:[#allocation1 + $0x8] sm:$0xff pattern:$0x75316420]
    %102 = vrot.lane.b32.xlu0 %v100, 1
    %v103 = vpop.permute.xlu0 %102
    %104 = vrot.lane.b32.xlu0 %v101, 1
    %v105 = vpop.permute.xlu0 %104
    %vm106 = vcmask 7168
    %v107 = vsel %vm106, %v103, %v105
    %v110 = vsel %vm106, 0.0, %v103
    %v111 = vsel %vm55, %v110, 0.0
    %v112 = vsel %vm56, %v107, 0.0
    %v115 = vrot.slane %v111, 4
    %v116 = vrot.slane %v112, 4
    %119 = vst [vmem:[#allocation2 + $0x10] sm:$0xf0] %v115
    %120 = vst [vmem:[#allocation2 + $0x18] sm:$0xf0] %v116
    %121 = vst [vmem:[#allocation1] ss:$2 sm:$0xff] %v36
    %v122 = vld.sshfl [vmem:[#allocation1] sm:$0xff pattern:$0x75316420]
    %v123 = vld.sshfl [vmem:[#allocation1 + $0x8] sm:$0xff pattern:$0x75316420]
    %126 = vst [vmem:[#allocation2 + $0x20] sm:$0xf] %v122
    %127 = vst [vmem:[#allocation2 + $0x28] sm:$0xf] %v123
    %128 = vst [vmem:[#allocation1] ss:$2 sm:$0xff] %v36
    %v129 = vld.sshfl [vmem:[#allocation1] sm:$0xff pattern:$0x75316420]
    %v130 = vld.sshfl [vmem:[#allocation1 + $0x8] sm:$0xff pattern:$0x75316420]
    %131 = vrot.lane.b32.xlu0 %v129, 127
    %v132 = vpop.permute.xlu0 %131
    %133 = vrot.lane.b32.xlu0 %v130, 127
    %v134 = vpop.permute.xlu0 %133
    %vm135 = vcmask 1039360
    %v136 = vsel %vm135, %v132, %v134
    %v139 = vsel %vm135, %v134, 0.0
    %v140 = vsel %vm93, %v136, 0.0
    %v141 = vsel %vm94, %v139, 0.0
    %v144 = vrot.slane %v140, 4
    %v145 = vrot.slane %v141, 4
    %148 = vst [vmem:[#allocation2 + $0x20] sm:$0xf0] %v144
    %149 = vst [vmem:[#allocation2 + $0x28] sm:$0xf0] %v145
    %150 = vst [vmem:[#allocation1] ss:$2 sm:$0xff] %v36
    %v151 = vld.sshfl [vmem:[#allocation1] sm:$0xff pattern:$0x75316420]
    %v152 = vld.sshfl [vmem:[#allocation1 + $0x8] sm:$0xff pattern:$0x75316420]
    %153 = vrot.lane.b32.xlu0 %v151, 113
    %v154 = vpop.permute.xlu0 %153
    %155 = vrot.lane.b32.xlu0 %v152, 113
    %v156 = vpop.permute.xlu0 %155
    %vm157 = vcmask 924672
    %v158 = vsel %vm157, %v154, %v156
    %v161 = vsel %vm157, %v156, 0.0
    %v162 = vsel %vm55, %v158, 0.0
    %v163 = vsel %vm56, %v161, 0.0
    %164 = vst [vmem:[#allocation2 + $0x30] sm:$0xf] %v162
    %165 = vst [vmem:[#allocation2 + $0x38] sm:$0xf] %v163
    %166 = vst [vmem:[#allocation1] ss:$2 sm:$0xff] %v36
    %v167 = vld.sshfl [vmem:[#allocation1] sm:$0xff pattern:$0x75316420]
    %v168 = vld.sshfl [vmem:[#allocation1 + $0x8] sm:$0xff pattern:$0x75316420]
    %169 = vrot.lane.b32.xlu0 %v167, 112
    %v170 = vpop.permute.xlu0 %169
    %171 = vrot.lane.b32.xlu0 %v168, 112
    %v172 = vpop.permute.xlu0 %171
    %vm173 = vcmask 916480
    %v174 = vsel %vm173, %v170, %v172
    %v176 = vsel %vm173, %v172, 0.0
    %v178 = vrot.slane %v174, 4
    %v179 = vrot.slane %v176, 4
    %182 = vst [vmem:[#allocation2 + $0x30] sm:$0xf0] %v178
    %183 = vst [vmem:[#allocation2 + $0x38] sm:$0xf0] %v179
    %184 = vst [vmem:[#allocation1] ss:$2 sm:$0xff] %v36
    %v185 = vld.sshfl [vmem:[#allocation1] sm:$0xff pattern:$0x75316420]
    %v186 = vld.sshfl [vmem:[#allocation1 + $0x8] sm:$0xff pattern:$0x75316420]
    %187 = vrot.lane.b32.xlu0 %v185, 111
    %v188 = vpop.permute.xlu0 %187
    %189 = vrot.lane.b32.xlu0 %v186, 111
    %v190 = vpop.permute.xlu0 %189
    %vm191 = vcmask 908288
    %v192 = vsel %vm191, %v188, %v190
    %v195 = vsel %vm191, %v190, 0.0
    %v196 = vsel %vm93, %v192, 0.0
    %v197 = vsel %vm94, %v195, 0.0
    %198 = vst [vmem:[#allocation2 + $0x40] sm:$0xf] %v196
    %199 = vst [vmem:[#allocation2 + $0x48] sm:$0xf] %v197
    %v200 = vld [vmem:[#allocation2] sm:$0xff]
    %v201 = vld [vmem:[#allocation2 + $0x8] sm:$0xff]
    %v202 = vld [vmem:[#allocation2 + $0x10] sm:$0xff]
    %v203 = vld [vmem:[#allocation2 + $0x18] sm:$0xff]
    %v204 = vld [vmem:[#allocation2 + $0x20] sm:$0xff]
    %v205 = vld [vmem:[#allocation2 + $0x28] sm:$0xff]
    %v206 = vld [vmem:[#allocation2 + $0x30] sm:$0xff]
    %v207 = vld [vmem:[#allocation2 + $0x38] sm:$0xff]
    %v208 = vld [vmem:[#allocation2 + $0x40] sm:$0xf]
    %v209 = vld [vmem:[#allocation2 + $0x48] sm:$0xf]
    %vm210 = vcmask 293888
    %v212 = vsel %vm210, %v39, 0
    %vm214 = vcmask 1043456
    %v216 = vsel %vm214, %v208, 0
    %v219 = vsel %vm214, %v209, 0
    %221 = vmatpush.msra.mxu0 0.0
    %222 = vmatpush.msra.mxu0 0.0
    %223 = vmatpush.msra.mxu0 0.0
    %224 = vmatpush.msra.mxu0 0.0
    %225 = vmatpush.msra.mxu0 0.0
    %226 = vmatpush.msra.mxu0 0.0
    %227 = vmatpush.msra.mxu0 0.0
    %228 = vmatpush.msra.mxu0 0.0
    %229 = vmatpush.msra.mxu0 0.0
    %230 = vmatpush.msra.mxu0 0.0
    %231 = vmatpush.msra.mxu0 0.0
    %232 = vmatpush.msra.mxu0 %v216
    %233 = vmatpush.msra.mxu0 %v206
    %234 = vmatpush.msra.mxu0 %v204
    %235 = vmatpush.msra.mxu0 %v202
    %236 = vmatpush.msra.mxu0 %v200
    %237 = vmatmul.f32.gmra.mxu0 %v212
    %v238 = vpop.f32.mrf.mxu0
    %v239 = vadd.f32 0.0, %v238
    %240 = vdwg.mxu0
    %241 = vmatpush.msra.mxu0 0.0
    %242 = vmatpush.msra.mxu0 0.0
    %243 = vmatpush.msra.mxu0 0.0
    %244 = vmatpush.msra.mxu0 0.0
    %245 = vmatpush.msra.mxu0 0.0
    %246 = vmatpush.msra.mxu0 0.0
    %247 = vmatpush.msra.mxu0 0.0
    %248 = vmatpush.msra.mxu0 0.0
    %249 = vmatpush.msra.mxu0 0.0
    %250 = vmatpush.msra.mxu0 0.0
    %251 = vmatpush.msra.mxu0 0.0
    %252 = vmatpush.msra.mxu0 %v219
    %253 = vmatpush.msra.mxu0 %v207
    %254 = vmatpush.msra.mxu0 %v205
    %255 = vmatpush.msra.mxu0 %v203
    %256 = vmatpush.msra.mxu0 %v201
    %257 = vmatmul.f32.gmra.mxu0 %v212
    %v258 = vpop.f32.mrf.mxu0
    %v259 = vadd.f32 0.0, %v258
    %260 = vdwg.mxu0
    %v261 = vadd.f32 %v239, %v259
    %262 = vadd.xlane.f32.xlu0 %v261
    %v263 = vpop.xlane.xlu0 %262
    %v264 = vadd.f32 %v263, 0.0
    %v265 = vmul.f32 %v239, %v239
    %v266 = vmul.f32 %v259, %v259
    %v267 = vadd.f32 %v265, %v266
    %268 = vadd.xlane.f32.xlu0 %v267
    %v269 = vpop.xlane.xlu0 %268
    %v270 = vadd.f32 %v269, 0.0
    %272 = vst [vmem:[#allocation1] ss:$2 sm:$0xff] %v38
    %v273 = vld.sshfl [vmem:[#allocation1] sm:$0xff pattern:$0x75316420]
    %v274 = vld.sshfl [vmem:[#allocation1 + $0x8] sm:$0xff pattern:$0x75316420]
    %275 = vrot.lane.b32.xlu0 %v273, 17
    %v276 = vpop.permute.xlu0 %275
    %277 = vrot.lane.b32.xlu0 %v274, 17
    %v278 = vpop.permute.xlu0 %277
    %v279 = vsel %vm48, %v276, %v278
    %v282 = vsel %vm48, 0.0, %v276
    %v283 = vsel %vm55, %v282, 0.0
    %v284 = vsel %vm56, %v279, 0.0
    %285 = vst [vmem:[#allocation2] sm:$0xf] %v283
    %286 = vst [vmem:[#allocation2 + $0x8] sm:$0xf] %v284
    %287 = vst [vmem:[#allocation1] ss:$2 sm:$0xff] %v38
    %v288 = vld.sshfl [vmem:[#allocation1] sm:$0xff pattern:$0x75316420]
    %v289 = vld.sshfl [vmem:[#allocation1 + $0x8] sm:$0xff pattern:$0x75316420]
    %290 = vrot.lane.b32.xlu0 %v288, 16
    %v291 = vpop.permute.xlu0 %290
    %292 = vrot.lane.b32.xlu0 %v289, 16
    %v293 = vpop.permute.xlu0 %292
    %v294 = vsel %vm68, %v291, %v293
    %v296 = vsel %vm68, 0.0, %v291
    %v298 = vrot.slane %v296, 4
    %v299 = vrot.slane %v294, 4
    %302 = vst [vmem:[#allocation2] sm:$0xf0] %v298
    %303 = vst [vmem:[#allocation2 + $0x8] sm:$0xf0] %v299
    %304 = vst [vmem:[#allocation1] ss:$2 sm:$0xff] %v38
    %v305 = vld.sshfl [vmem:[#allocation1] sm:$0xff pattern:$0x75316420]
    %v306 = vld.sshfl [vmem:[#allocation1 + $0x8] sm:$0xff pattern:$0x75316420]
    %307 = vrot.lane.b32.xlu0 %v305, 15
    %v308 = vpop.permute.xlu0 %307
    %309 = vrot.lane.b32.xlu0 %v306, 15
    %v310 = vpop.permute.xlu0 %309
    %v311 = vsel %vm86, %v308, %v310
    %v314 = vsel %vm86, 0.0, %v308
    %v315 = vsel %vm93, %v314, 0.0
    %v316 = vsel %vm94, %v311, 0.0
    %317 = vst [vmem:[#allocation2 + $0x10] sm:$0xf] %v315
    %318 = vst [vmem:[#allocation2 + $0x18] sm:$0xf] %v316
    %319 = vst [vmem:[#allocation1] ss:$2 sm:$0xff] %v38
    %v320 = vld.sshfl [vmem:[#allocation1] sm:$0xff pattern:$0x75316420]
    %v321 = vld.sshfl [vmem:[#allocation1 + $0x8] sm:$0xff pattern:$0x75316420]
    %322 = vrot.lane.b32.xlu0 %v320, 1
    %v323 = vpop.permute.xlu0 %322
    %324 = vrot.lane.b32.xlu0 %v321, 1
    %v325 = vpop.permute.xlu0 %324
    %v326 = vsel %vm106, %v323, %v325
    %v329 = vsel %vm106, 0.0, %v323
    %v330 = vsel %vm55, %v329, 0.0
    %v331 = vsel %vm56, %v326, 0.0
    %v334 = vrot.slane %v330, 4
    %v335 = vrot.slane %v331, 4
    %338 = vst [vmem:[#allocation2 + $0x10] sm:$0xf0] %v334
    %339 = vst [vmem:[#allocation2 + $0x18] sm:$0xf0] %v335
    %340 = vst [vmem:[#allocation1] ss:$2 sm:$0xff] %v38
    %v341 = vld.sshfl [vmem:[#allocation1] sm:$0xff pattern:$0x75316420]
    %v342 = vld.sshfl [vmem:[#allocation1 + $0x8] sm:$0xff pattern:$0x75316420]
    %345 = vst [vmem:[#allocation2 + $0x20] sm:$0xf] %v341
    %346 = vst [vmem:[#allocation2 + $0x28] sm:$0xf] %v342
    %347 = vst [vmem:[#allocation1] ss:$2 sm:$0xff] %v38
    %v348 = vld.sshfl [vmem:[#allocation1] sm:$0xff pattern:$0x75316420]
    %v349 = vld.sshfl [vmem:[#allocation1 + $0x8] sm:$0xff pattern:$0x75316420]
    %350 = vrot.lane.b32.xlu0 %v348, 127
    %v351 = vpop.permute.xlu0 %350
    %352 = vrot.lane.b32.xlu0 %v349, 127
    %v353 = vpop.permute.xlu0 %352
    %v354 = vsel %vm135, %v351, %v353
    %v357 = vsel %vm135, %v353, 0.0
    %v358 = vsel %vm93, %v354, 0.0
    %v359 = vsel %vm94, %v357, 0.0
    %v362 = vrot.slane %v358, 4
    %v363 = vrot.slane %v359, 4
    %366 = vst [vmem:[#allocation2 + $0x20] sm:$0xf0] %v362
    %367 = vst [vmem:[#allocation2 + $0x28] sm:$0xf0] %v363
    %368 = vst [vmem:[#allocation1] ss:$2 sm:$0xff] %v38
    %v369 = vld.sshfl [vmem:[#allocation1] sm:$0xff pattern:$0x75316420]
    %v370 = vld.sshfl [vmem:[#allocation1 + $0x8] sm:$0xff pattern:$0x75316420]
    %371 = vrot.lane.b32.xlu0 %v369, 113
    %v372 = vpop.permute.xlu0 %371
    %373 = vrot.lane.b32.xlu0 %v370, 113
    %v374 = vpop.permute.xlu0 %373
    %v375 = vsel %vm157, %v372, %v374
    %v378 = vsel %vm157, %v374, 0.0
    %v379 = vsel %vm55, %v375, 0.0
    %v380 = vsel %vm56, %v378, 0.0
    %381 = vst [vmem:[#allocation2 + $0x30] sm:$0xf] %v379
    %382 = vst [vmem:[#allocation2 + $0x38] sm:$0xf] %v380
    %383 = vst [vmem:[#allocation1] ss:$2 sm:$0xff] %v38
    %v384 = vld.sshfl [vmem:[#allocation1] sm:$0xff pattern:$0x75316420]
    %v385 = vld.sshfl [vmem:[#allocation1 + $0x8] sm:$0xff pattern:$0x75316420]
    %386 = vrot.lane.b32.xlu0 %v384, 112
    %v387 = vpop.permute.xlu0 %386
    %388 = vrot.lane.b32.xlu0 %v385, 112
    %v389 = vpop.permute.xlu0 %388
    %v390 = vsel %vm173, %v387, %v389
    %v392 = vsel %vm173, %v389, 0.0
    %v394 = vrot.slane %v390, 4
    %v395 = vrot.slane %v392, 4
    %398 = vst [vmem:[#allocation2 + $0x30] sm:$0xf0] %v394
    %399 = vst [vmem:[#allocation2 + $0x38] sm:$0xf0] %v395
    %400 = vst [vmem:[#allocation1] ss:$2 sm:$0xff] %v38
    %v401 = vld.sshfl [vmem:[#allocation1] sm:$0xff pattern:$0x75316420]
    %v402 = vld.sshfl [vmem:[#allocation1 + $0x8] sm:$0xff pattern:$0x75316420]
    %403 = vrot.lane.b32.xlu0 %v401, 111
    %v404 = vpop.permute.xlu0 %403
    %405 = vrot.lane.b32.xlu0 %v402, 111
    %v406 = vpop.permute.xlu0 %405
    %v407 = vsel %vm191, %v404, %v406
    %v410 = vsel %vm191, %v406, 0.0
    %v411 = vsel %vm93, %v407, 0.0
    %v412 = vsel %vm94, %v410, 0.0
    %413 = vst [vmem:[#allocation2 + $0x40] sm:$0xf] %v411
    %414 = vst [vmem:[#allocation2 + $0x48] sm:$0xf] %v412
    %v415 = vld [vmem:[#allocation2] sm:$0xff]
    %v416 = vld [vmem:[#allocation2 + $0x8] sm:$0xff]
    %v417 = vld [vmem:[#allocation2 + $0x10] sm:$0xff]
    %v418 = vld [vmem:[#allocation2 + $0x18] sm:$0xff]
    %v419 = vld [vmem:[#allocation2 + $0x20] sm:$0xff]
    %v420 = vld [vmem:[#allocation2 + $0x28] sm:$0xff]
    %v421 = vld [vmem:[#allocation2 + $0x30] sm:$0xff]
    %v422 = vld [vmem:[#allocation2 + $0x38] sm:$0xff]
    %v423 = vld [vmem:[#allocation2 + $0x40] sm:$0xf]
    %v424 = vld [vmem:[#allocation2 + $0x48] sm:$0xf]
    %v426 = vsel %vm214, %v423, 0
    %v429 = vsel %vm214, %v424, 0
    %431 = vmatpush.msra.mxu0 0.0
    %432 = vmatpush.msra.mxu0 0.0
    %433 = vmatpush.msra.mxu0 0.0
    %434 = vmatpush.msra.mxu0 0.0
    %435 = vmatpush.msra.mxu0 0.0
    %436 = vmatpush.msra.mxu0 0.0
    %437 = vmatpush.msra.mxu0 0.0
    %438 = vmatpush.msra.mxu0 0.0
    %439 = vmatpush.msra.mxu0 0.0
    %440 = vmatpush.msra.mxu0 0.0
    %441 = vmatpush.msra.mxu0 0.0
    %442 = vmatpush.msra.mxu0 %v426
    %443 = vmatpush.msra.mxu0 %v421
    %444 = vmatpush.msra.mxu0 %v419
    %445 = vmatpush.msra.mxu0 %v417
    %446 = vmatpush.msra.mxu0 %v415
    %447 = vmatmul.f32.gmra.mxu0 %v212
    %v448 = vpop.f32.mrf.mxu0
    %v449 = vadd.f32 0.0, %v448
    %450 = vdwg.mxu0
    %451 = vmatpush.msra.mxu0 0.0
    %452 = vmatpush.msra.mxu0 0.0
    %453 = vmatpush.msra.mxu0 0.0
    %454 = vmatpush.msra.mxu0 0.0
    %455 = vmatpush.msra.mxu0 0.0
    %456 = vmatpush.msra.mxu0 0.0
    %457 = vmatpush.msra.mxu0 0.0
    %458 = vmatpush.msra.mxu0 0.0
    %459 = vmatpush.msra.mxu0 0.0
    %460 = vmatpush.msra.mxu0 0.0
    %461 = vmatpush.msra.mxu0 0.0
    %462 = vmatpush.msra.mxu0 %v429
    %463 = vmatpush.msra.mxu0 %v422
    %464 = vmatpush.msra.mxu0 %v420
    %465 = vmatpush.msra.mxu0 %v418
    %466 = vmatpush.msra.mxu0 %v416
    %467 = vmatmul.f32.gmra.mxu0 %v212
    %v468 = vpop.f32.mrf.mxu0
    %v469 = vadd.f32 0.0, %v468
    %470 = vdwg.mxu0
    %v471 = vadd.f32 %v449, %v469
    %472 = vadd.xlane.f32.xlu0 %v471
    %v473 = vpop.xlane.xlu0 %472
    %v474 = vadd.f32 %v264, %v473
    %v475 = vmul.f32 %v449, %v449
    %v476 = vmul.f32 %v469, %v469
    %v477 = vadd.f32 %v475, %v476
    %478 = vadd.xlane.f32.xlu0 %v477
    %v479 = vpop.xlane.xlu0 %478
    %v480 = vadd.f32 %v270, %v479
    %v481 = vmul.f32 %v474, 0.001953125
    %v482 = vmul.f32 %v480, 0.001953125
    %v483 = vmul.f32 %v481, %v481
    %v484 = vsub.f32 %v482, %v483
    %v485 = vld [vmem:[%s2] sm:$0xff]
    %v486 = vadd.f32 %v484, 1e-05
    %v487 = vrsqrt.pop %v486
    %v488 = vmul.f32 %v487, %v486
    %v489 = vmul.f32 %v488, %v487
    %v490 = vmul.f32 0.5, %v489
    %v491 = vsub.f32 1.5, %v490
    %v492 = vmul.f32 %v487, %v491
    %vm493 = vweird.f32 %v486
    %vm494 = vweird.f32 %v487
    %vm495 = vmor %vm493, %vm494
    %v496 = vsel %vm495, %v487, %v492
    %v497 = vmul.f32 %v485, %v496
    %v498 = vld [vmem:[%s3] sm:$0xff]
    %v499 = vmul.f32 %v481, %v497
    %v500 = vsub.f32 %v498, %v499
    %502 = vset.pattern.permute.xlu0 0
    %503 = vperm.xlu0 %502, %v497
    %v504 = vpop.permute.xlu0 %503
    %v506 = vmul.f32 %v239, %v504
    %v507 = vmul.f32 %v259, %v504
    %509 = vset.pattern.permute.xlu0 0
    %510 = vperm.xlu0 %509, %v500
    %v511 = vpop.permute.xlu0 %510
    %v513 = vadd.f32 %v506, %v511
    %v514 = vadd.f32 %v507, %v511
    %v515 = vmax.f32 %v513, 0.0
    %v516 = vmax.f32 %v514, 0.0
    %v517 = vmul.f32 %v449, %v504
    %v518 = vmul.f32 %v469, %v504
    %v519 = vadd.f32 %v517, %v511
    %v520 = vadd.f32 %v518, %v511
    %v521 = vmax.f32 %v519, 0.0
    %v522 = vmax.f32 %v520, 0.0
    %v523 = vld [vmem:[%s4] sm:$0xff]
    %526 = vrot.lane.b32.xlu0 %v515, 17
    %v527 = vpop.permute.xlu0 %526
    %528 = vrot.lane.b32.xlu0 %v516, 17
    %v529 = vpop.permute.xlu0 %528
    %v530 = vsel %vm48, %v527, %v529
    %v533 = vsel %vm48, 0.0, %v527
    %v534 = vsel %vm55, %v533, 0.0
    %v535 = vsel %vm56, %v530, 0.0
    %536 = vst [vmem:[#allocation3] sm:$0xff] %v534
    %537 = vst [vmem:[#allocation3 + $0x8] sm:$0xff] %v535
    %538 = vrot.lane.b32.xlu0 %v515, 16
    %v539 = vpop.permute.xlu0 %538
    %540 = vrot.lane.b32.xlu0 %v516, 16
    %v541 = vpop.permute.xlu0 %540
    %v542 = vsel %vm68, %v539, %v541
    %v545 = vsel %vm68, 0.0, %v539
    %546 = vst [vmem:[#allocation3 + $0x10] sm:$0xff] %v545
    %547 = vst [vmem:[#allocation3 + $0x18] sm:$0xff] %v542
    %548 = vrot.lane.b32.xlu0 %v515, 15
    %v549 = vpop.permute.xlu0 %548
    %550 = vrot.lane.b32.xlu0 %v516, 15
    %v551 = vpop.permute.xlu0 %550
    %v552 = vsel %vm86, %v549, %v551
    %v555 = vsel %vm86, 0.0, %v549
    %v556 = vsel %vm93, %v555, 0.0
    %v557 = vsel %vm94, %v552, 0.0
    %558 = vst [vmem:[#allocation3 + $0x20] sm:$0xff] %v556
    %559 = vst [vmem:[#allocation3 + $0x28] sm:$0xff] %v557
    %560 = vrot.lane.b32.xlu0 %v515, 1
    %v561 = vpop.permute.xlu0 %560
    %562 = vrot.lane.b32.xlu0 %v516, 1
    %v563 = vpop.permute.xlu0 %562
    %v564 = vsel %vm106, %v561, %v563
    %v567 = vsel %vm106, 0.0, %v561
    %v568 = vsel %vm55, %v567, 0.0
    %v569 = vsel %vm56, %v564, 0.0
    %570 = vst [vmem:[#allocation3 + $0x30] sm:$0xff] %v568
    %571 = vst [vmem:[#allocation3 + $0x38] sm:$0xff] %v569
    %572 = vst [vmem:[#allocation3 + $0x40] sm:$0xff] %v515
    %573 = vst [vmem:[#allocation3 + $0x48] sm:$0xff] %v516
    %574 = vrot.lane.b32.xlu0 %v515, 127
    %v575 = vpop.permute.xlu0 %574
    %576 = vrot.lane.b32.xlu0 %v516, 127
    %v577 = vpop.permute.xlu0 %576
    %v578 = vsel %vm135, %v575, %v577
    %v581 = vsel %vm135, %v577, 0.0
    %v582 = vsel %vm93, %v578, 0.0
    %v583 = vsel %vm94, %v581, 0.0
    %584 = vst [vmem:[#allocation3 + $0x50] sm:$0xff] %v582
    %585 = vst [vmem:[#allocation3 + $0x58] sm:$0xff] %v583
    %586 = vrot.lane.b32.xlu0 %v515, 113
    %v587 = vpop.permute.xlu0 %586
    %588 = vrot.lane.b32.xlu0 %v516, 113
    %v589 = vpop.permute.xlu0 %588
    %v590 = vsel %vm157, %v587, %v589
    %v593 = vsel %vm157, %v589, 0.0
    %v594 = vsel %vm55, %v590, 0.0
    %v595 = vsel %vm56, %v593, 0.0
    %596 = vst [vmem:[#allocation3 + $0x60] sm:$0xff] %v594
    %597 = vst [vmem:[#allocation3 + $0x68] sm:$0xff] %v595
    %598 = vrot.lane.b32.xlu0 %v515, 112
    %v599 = vpop.permute.xlu0 %598
    %600 = vrot.lane.b32.xlu0 %v516, 112
    %v601 = vpop.permute.xlu0 %600
    %v602 = vsel %vm173, %v599, %v601
    %v605 = vsel %vm173, %v601, 0.0
    %606 = vst [vmem:[#allocation3 + $0x70] sm:$0xff] %v602
    %607 = vst [vmem:[#allocation3 + $0x78] sm:$0xff] %v605
    %608 = vrot.lane.b32.xlu0 %v515, 111
    %v609 = vpop.permute.xlu0 %608
    %610 = vrot.lane.b32.xlu0 %v516, 111
    %v611 = vpop.permute.xlu0 %610
    %v612 = vsel %vm191, %v609, %v611
    %v615 = vsel %vm191, %v611, 0.0
    %v616 = vsel %vm93, %v612, 0.0
    %v617 = vsel %vm94, %v615, 0.0
    %618 = vst [vmem:[#allocation3 + $0x80] sm:$0xff] %v616
    %619 = vst [vmem:[#allocation3 + $0x88] sm:$0xff] %v617
    %v620 = vld [vmem:[#allocation3] sm:$0xff]
    %v621 = vld [vmem:[#allocation3 + $0x8] sm:$0xff]
    %v622 = vld [vmem:[#allocation3 + $0x10] sm:$0xff]
    %v623 = vld [vmem:[#allocation3 + $0x18] sm:$0xff]
    %v624 = vld [vmem:[#allocation3 + $0x20] sm:$0xff]
    %v625 = vld [vmem:[#allocation3 + $0x28] sm:$0xff]
    %v626 = vld [vmem:[#allocation3 + $0x30] sm:$0xff]
    %v627 = vld [vmem:[#allocation3 + $0x38] sm:$0xff]
    %v628 = vld [vmem:[#allocation3 + $0x40] sm:$0xff]
    %v629 = vld [vmem:[#allocation3 + $0x48] sm:$0xff]
    %v630 = vld [vmem:[#allocation3 + $0x50] sm:$0xff]
    %v631 = vld [vmem:[#allocation3 + $0x58] sm:$0xff]
    %v632 = vld [vmem:[#allocation3 + $0x60] sm:$0xff]
    %v633 = vld [vmem:[#allocation3 + $0x68] sm:$0xff]
    %v634 = vld [vmem:[#allocation3 + $0x70] sm:$0xff]
    %v635 = vld [vmem:[#allocation3 + $0x78] sm:$0xff]
    %v636 = vld [vmem:[#allocation3 + $0x80] sm:$0xff]
    %v637 = vld [vmem:[#allocation3 + $0x88] sm:$0xff]
    %vm638 = vcmask 588800
    %v640 = vsel %vm638, %v523, 0
    %642 = vmatpush.msra.mxu0 0.0
    %643 = vmatpush.msra.mxu0 0.0
    %644 = vmatpush.msra.mxu0 0.0
    %645 = vmatpush.msra.mxu0 0.0
    %646 = vmatpush.msra.mxu0 0.0
    %647 = vmatpush.msra.mxu0 0.0
    %648 = vmatpush.msra.mxu0 0.0
    %649 = vmatpush.msra.mxu0 %v636
    %650 = vmatpush.msra.mxu0 %v634
    %651 = vmatpush.msra.mxu0 %v632
    %652 = vmatpush.msra.mxu0 %v630
    %653 = vmatpush.msra.mxu0 %v628
    %654 = vmatpush.msra.mxu0 %v626
    %655 = vmatpush.msra.mxu0 %v624
    %656 = vmatpush.msra.mxu0 %v622
    %657 = vmatpush.msra.mxu0 %v620
    %658 = vmatmul.f32.gmra.mxu0 %v640
    %v659 = vpop.f32.mrf.mxu0
    %v660 = vadd.f32 0.0, %v659
    %661 = vdwg.mxu0
    %662 = vmatpush.msra.mxu0 0.0
    %663 = vmatpush.msra.mxu0 0.0
    %664 = vmatpush.msra.mxu0 0.0
    %665 = vmatpush.msra.mxu0 0.0
    %666 = vmatpush.msra.mxu0 0.0
    %667 = vmatpush.msra.mxu0 0.0
    %668 = vmatpush.msra.mxu0 0.0
    %669 = vmatpush.msra.mxu0 %v637
    %670 = vmatpush.msra.mxu0 %v635
    %671 = vmatpush.msra.mxu0 %v633
    %672 = vmatpush.msra.mxu0 %v631
    %673 = vmatpush.msra.mxu0 %v629
    %674 = vmatpush.msra.mxu0 %v627
    %675 = vmatpush.msra.mxu0 %v625
    %676 = vmatpush.msra.mxu0 %v623
    %677 = vmatpush.msra.mxu0 %v621
    %678 = vmatmul.f32.gmra.mxu0 %v640
    %v679 = vpop.f32.mrf.mxu0
    %v680 = vadd.f32 0.0, %v679
    %681 = vdwg.mxu0
    %v682 = vadd.f32 %v660, %v680
    %683 = vadd.xlane.f32.xlu0 %v682
    %v684 = vpop.xlane.xlu0 %683
    %v685 = vadd.f32 %v684, 0.0
    %v686 = vmul.f32 %v660, %v660
    %v687 = vmul.f32 %v680, %v680
    %v688 = vadd.f32 %v686, %v687
    %689 = vadd.xlane.f32.xlu0 %v688
    %v690 = vpop.xlane.xlu0 %689
    %v691 = vadd.f32 %v690, 0.0
    %694 = vrot.lane.b32.xlu0 %v521, 17
    %v695 = vpop.permute.xlu0 %694
    %696 = vrot.lane.b32.xlu0 %v522, 17
    %v697 = vpop.permute.xlu0 %696
    %v698 = vsel %vm48, %v695, %v697
    %v701 = vsel %vm48, 0.0, %v695
    %v702 = vsel %vm55, %v701, 0.0
    %v703 = vsel %vm56, %v698, 0.0
    %704 = vst [vmem:[#allocation3] sm:$0xff] %v702
    %705 = vst [vmem:[#allocation3 + $0x8] sm:$0xff] %v703
    %706 = vrot.lane.b32.xlu0 %v521, 16
    %v707 = vpop.permute.xlu0 %706
    %708 = vrot.lane.b32.xlu0 %v522, 16
    %v709 = vpop.permute.xlu0 %708
    %v710 = vsel %vm68, %v707, %v709
    %v713 = vsel %vm68, 0.0, %v707
    %714 = vst [vmem:[#allocation3 + $0x10] sm:$0xff] %v713
    %715 = vst [vmem:[#allocation3 + $0x18] sm:$0xff] %v710
    %716 = vrot.lane.b32.xlu0 %v521, 15
    %v717 = vpop.permute.xlu0 %716
    %718 = vrot.lane.b32.xlu0 %v522, 15
    %v719 = vpop.permute.xlu0 %718
    %v720 = vsel %vm86, %v717, %v719
    %v723 = vsel %vm86, 0.0, %v717
    %v724 = vsel %vm93, %v723, 0.0
    %v725 = vsel %vm94, %v720, 0.0
    %726 = vst [vmem:[#allocation3 + $0x20] sm:$0xff] %v724
    %727 = vst [vmem:[#allocation3 + $0x28] sm:$0xff] %v725
    %728 = vrot.lane.b32.xlu0 %v521, 1
    %v729 = vpop.permute.xlu0 %728
    %730 = vrot.lane.b32.xlu0 %v522, 1
    %v731 = vpop.permute.xlu0 %730
    %v732 = vsel %vm106, %v729, %v731
    %v735 = vsel %vm106, 0.0, %v729
    %v736 = vsel %vm55, %v735, 0.0
    %v737 = vsel %vm56, %v732, 0.0
    %738 = vst [vmem:[#allocation3 + $0x30] sm:$0xff] %v736
    %739 = vst [vmem:[#allocation3 + $0x38] sm:$0xff] %v737
    %740 = vst [vmem:[#allocation3 + $0x40] sm:$0xff] %v521
    %741 = vst [vmem:[#allocation3 + $0x48] sm:$0xff] %v522
    %742 = vrot.lane.b32.xlu0 %v521, 127
    %v743 = vpop.permute.xlu0 %742
    %744 = vrot.lane.b32.xlu0 %v522, 127
    %v745 = vpop.permute.xlu0 %744
    %v746 = vsel %vm135, %v743, %v745
    %v749 = vsel %vm135, %v745, 0.0
    %v750 = vsel %vm93, %v746, 0.0
    %v751 = vsel %vm94, %v749, 0.0
    %752 = vst [vmem:[#allocation3 + $0x50] sm:$0xff] %v750
    %753 = vst [vmem:[#allocation3 + $0x58] sm:$0xff] %v751
    %754 = vrot.lane.b32.xlu0 %v521, 113
    %v755 = vpop.permute.xlu0 %754
    %756 = vrot.lane.b32.xlu0 %v522, 113
    %v757 = vpop.permute.xlu0 %756
    %v758 = vsel %vm157, %v755, %v757
    %v761 = vsel %vm157, %v757, 0.0
    %v762 = vsel %vm55, %v758, 0.0
    %v763 = vsel %vm56, %v761, 0.0
    %764 = vst [vmem:[#allocation3 + $0x60] sm:$0xff] %v762
    %765 = vst [vmem:[#allocation3 + $0x68] sm:$0xff] %v763
    %766 = vrot.lane.b32.xlu0 %v521, 112
    %v767 = vpop.permute.xlu0 %766
    %768 = vrot.lane.b32.xlu0 %v522, 112
    %v769 = vpop.permute.xlu0 %768
    %v770 = vsel %vm173, %v767, %v769
    %v773 = vsel %vm173, %v769, 0.0
    %774 = vst [vmem:[#allocation3 + $0x70] sm:$0xff] %v770
    %775 = vst [vmem:[#allocation3 + $0x78] sm:$0xff] %v773
    %776 = vrot.lane.b32.xlu0 %v521, 111
    %v777 = vpop.permute.xlu0 %776
    %778 = vrot.lane.b32.xlu0 %v522, 111
    %v779 = vpop.permute.xlu0 %778
    %v780 = vsel %vm191, %v777, %v779
    %v783 = vsel %vm191, %v779, 0.0
    %v784 = vsel %vm93, %v780, 0.0
    %v785 = vsel %vm94, %v783, 0.0
    %786 = vst [vmem:[#allocation3 + $0x80] sm:$0xff] %v784
    %787 = vst [vmem:[#allocation3 + $0x88] sm:$0xff] %v785
    %v788 = vld [vmem:[#allocation3] sm:$0xff]
    %v789 = vld [vmem:[#allocation3 + $0x8] sm:$0xff]
    %v790 = vld [vmem:[#allocation3 + $0x10] sm:$0xff]
    %v791 = vld [vmem:[#allocation3 + $0x18] sm:$0xff]
    %v792 = vld [vmem:[#allocation3 + $0x20] sm:$0xff]
    %v793 = vld [vmem:[#allocation3 + $0x28] sm:$0xff]
    %v794 = vld [vmem:[#allocation3 + $0x30] sm:$0xff]
    %v795 = vld [vmem:[#allocation3 + $0x38] sm:$0xff]
    %v796 = vld [vmem:[#allocation3 + $0x40] sm:$0xff]
    %v797 = vld [vmem:[#allocation3 + $0x48] sm:$0xff]
    %v798 = vld [vmem:[#allocation3 + $0x50] sm:$0xff]
    %v799 = vld [vmem:[#allocation3 + $0x58] sm:$0xff]
    %v800 = vld [vmem:[#allocation3 + $0x60] sm:$0xff]
    %v801 = vld [vmem:[#allocation3 + $0x68] sm:$0xff]
    %v802 = vld [vmem:[#allocation3 + $0x70] sm:$0xff]
    %v803 = vld [vmem:[#allocation3 + $0x78] sm:$0xff]
    %v804 = vld [vmem:[#allocation3 + $0x80] sm:$0xff]
    %v805 = vld [vmem:[#allocation3 + $0x88] sm:$0xff]
    %806 = vmatpush.msra.mxu0 0.0
    %807 = vmatpush.msra.mxu0 0.0
    %808 = vmatpush.msra.mxu0 0.0
    %809 = vmatpush.msra.mxu0 0.0
    %810 = vmatpush.msra.mxu0 0.0
    %811 = vmatpush.msra.mxu0 0.0
    %812 = vmatpush.msra.mxu0 0.0
    %813 = vmatpush.msra.mxu0 %v804
    %814 = vmatpush.msra.mxu0 %v802
    %815 = vmatpush.msra.mxu0 %v800
    %816 = vmatpush.msra.mxu0 %v798
    %817 = vmatpush.msra.mxu0 %v796
    %818 = vmatpush.msra.mxu0 %v794
    %819 = vmatpush.msra.mxu0 %v792
    %820 = vmatpush.msra.mxu0 %v790
    %821 = vmatpush.msra.mxu0 %v788
    %822 = vmatmul.f32.gmra.mxu0 %v640
    %v823 = vpop.f32.mrf.mxu0
    %v824 = vadd.f32 0.0, %v823
    %825 = vdwg.mxu0
    %826 = vmatpush.msra.mxu0 0.0
    %827 = vmatpush.msra.mxu0 0.0
    %828 = vmatpush.msra.mxu0 0.0
    %829 = vmatpush.msra.mxu0 0.0
    %830 = vmatpush.msra.mxu0 0.0
    %831 = vmatpush.msra.mxu0 0.0
    %832 = vmatpush.msra.mxu0 0.0
    %833 = vmatpush.msra.mxu0 %v805
    %834 = vmatpush.msra.mxu0 %v803
    %835 = vmatpush.msra.mxu0 %v801
    %836 = vmatpush.msra.mxu0 %v799
    %837 = vmatpush.msra.mxu0 %v797
    %838 = vmatpush.msra.mxu0 %v795
    %839 = vmatpush.msra.mxu0 %v793
    %840 = vmatpush.msra.mxu0 %v791
    %841 = vmatpush.msra.mxu0 %v789
    %842 = vmatmul.f32.gmra.mxu0 %v640
    %v843 = vpop.f32.mrf.mxu0
    %v844 = vadd.f32 0.0, %v843
    %845 = vdwg.mxu0
    %v846 = vadd.f32 %v824, %v844
    %847 = vadd.xlane.f32.xlu0 %v846
    %v848 = vpop.xlane.xlu0 %847
    %v849 = vadd.f32 %v685, %v848
    %v850 = vmul.f32 %v824, %v824
    %v851 = vmul.f32 %v844, %v844
    %v852 = vadd.f32 %v850, %v851
    %853 = vadd.xlane.f32.xlu0 %v852
    %v854 = vpop.xlane.xlu0 %853
    %v855 = vadd.f32 %v691, %v854
    %v856 = vmul.f32 %v849, 0.001953125
    %v857 = vmul.f32 %v855, 0.001953125
    %v858 = vmul.f32 %v856, %v856
    %v859 = vsub.f32 %v857, %v858
    %v860 = vld [vmem:[%s5] sm:$0xff]
    %v861 = vadd.f32 %v859, 1e-05
    %v862 = vrsqrt.pop %v861
    %v863 = vmul.f32 %v862, %v861
    %v864 = vmul.f32 %v863, %v862
    %v865 = vmul.f32 0.5, %v864
    %v866 = vsub.f32 1.5, %v865
    %v867 = vmul.f32 %v862, %v866
    %vm868 = vweird.f32 %v861
    %vm869 = vweird.f32 %v862
    %vm870 = vmor %vm868, %vm869
    %v871 = vsel %vm870, %v862, %v867
    %v872 = vmul.f32 %v860, %v871
    %v873 = vld [vmem:[%s6] sm:$0xff]
    %v874 = vmul.f32 %v856, %v872
    %v875 = vsub.f32 %v873, %v874
    %877 = vset.pattern.permute.xlu0 0
    %878 = vperm.xlu0 %877, %v872
    %v879 = vpop.permute.xlu0 %878
    %v881 = vmul.f32 %v660, %v879
    %v882 = vmul.f32 %v680, %v879
    %884 = vset.pattern.permute.xlu0 0
    %885 = vperm.xlu0 %884, %v875
    %v886 = vpop.permute.xlu0 %885
    %v888 = vadd.f32 %v881, %v886
    %v889 = vadd.f32 %v882, %v886
    %v890 = vmax.f32 %v888, 0.0
    %v891 = vmax.f32 %v889, 0.0
    %892 = vst [vmem:[#allocation4] sm:$0xff] %v890
    %893 = vst [vmem:[#allocation4 + $0x8] sm:$0xff] %v891
    %v894 = vmul.f32 %v824, %v879
    %v895 = vmul.f32 %v844, %v879
    %v896 = vadd.f32 %v894, %v886
    %v897 = vadd.f32 %v895, %v886
    %v898 = vmax.f32 %v896, 0.0
    %v899 = vmax.f32 %v897, 0.0
    %s900 = scalar_lea.vmem [#allocation4], 16
    %901 = vst [vmem:[%s900] sm:$0xff] %v898
    %902 = vst [vmem:[%s900 + $0x8] sm:$0xff] %v899
    // Predicated region
    $region30: #{tpu_custom_call.1} parent=1 // pred_check
      _
    $region31: #{tpu_custom_call.1} parent=1 // pred_check_branch
      %904 = sbr.rel (0) target = $region33
    $region32: #{tpu_custom_call.1} parent=1 // pred_region
      %906 = vsyncadd [#allocation5], 0
      %s907 = sshll.u32 [#allocation4], 4
      %s908 = int_to_ptr.vmem [resolvable:$true] %s907
      %s909 = sshll.u32 %s7, 4
      %s910 = int_to_ptr.hbm [resolvable:$true] %s909
      %915 = dma.vmem_to_hbm [thread:$0]  %s908, 512, %s910, [#allocation5], 256, 256, 16
    $region33: #{tpu_custom_call.1} parent=1 // pred_fallthru
      _
    // Predicated region
    $region34: #{tpu_custom_call.1} parent=1 // pred_check
      _
    $region35: #{tpu_custom_call.1} parent=1 // pred_check_branch
      %917 = sbr.rel (0) target = $region37
    $region36: #{tpu_custom_call.1} parent=1 // pred_region
      %919 = dma.done [#allocation5], 512
    $region37: #{tpu_custom_call.1} parent=1 // pred_fallthru
      _
    %920 = vsyncpa [#allocation5], 1

</llo_original>
